<compile_context>
chip_gen: v5e
topology: v5e:2x2
jax: 0.10.0
libtpu: 0.0.40
codegen_flags: <defaults>
</compile_context>

<pallas_src>
import functools

import jax
import jax.numpy as jnp
from jax.experimental import pallas as pl
from jax.experimental.pallas import tpu as pltpu


# ----------------------------- Pallas kernel -------------------------------- #
def _convlstm_kernel(x_ref, w_ref, b_ref, out_ref, h_s, c_s, xh_s, *,
                     p_pre, cin, chid):
    """Fused ConvLSTM recurrence; one grid step == one LSTM time step.

    x_ref  : (1, NB, H, W, Cin)   bf16 encoder feature for step min(t, p_pre-1)
    w_ref  : (9*Ccat, 4*Chid)     bf16 fused conv weights (tap-major im2col order)
    b_ref  : (1, 4*Chid)          f32 fused bias (b_input + b_hidden)
    out_ref: (1, NB, H, W, Chid)  f32 hidden-state output block
    h_s/c_s: (NB, H, W, Chid)     f32 recurrent state, resident in VMEM
    xh_s   : (NB, H+2, W+2, Ccat) bf16 zero-padded concat([x, h]) staging buffer
    """
    t = pl.program_id(1)
    NB, H, W, _ = h_s.shape
    M = NB * H * W
    ccat = cin + chid

    # New batch block: zero the recurrent state and the padded [x|h] buffer.
    # The halo stays zero for all later steps; only the interior is rewritten.
    @pl.when(t == 0)
    def _init():
        h_s[...] = jnp.zeros_like(h_s)
        c_s[...] = jnp.zeros_like(c_s)
        xh_s[...] = jnp.zeros_like(xh_s)

    h_prev = h_s[...]                                            # (NB,H,W,Chid) f32

    # Hidden-state channels of the conv input (cast to bf16 for the MXU).
    xh_s[:, 1:H + 1, 1:W + 1, cin:ccat] = h_prev.astype(xh_s.dtype)

    # Input channels: encoder feature while t < p_pre, else the hidden state
    # (autoregressive decode feeds h as x, exactly like the PyTorch module).
    @pl.when(t < p_pre)
    def _use_feature():
        xh_s[:, 1:H + 1, 1:W + 1, 0:cin] = x_ref[0]

    @pl.when(t >= p_pre)
    def _use_hidden():
        xh_s[:, 1:H + 1, 1:W + 1, 0:cin] = h_prev.astype(xh_s.dtype)

    # im2col: one (M, 9*Ccat) bf16 patch, tap-major (dy, dx) then channel —
    # matches w_ref = w_hwio.reshape(9*Ccat, 4*Chid).
    xh = xh_s[...]
    patch = jnp.concatenate(
        [xh[:, dy:dy + H, dx:dx + W, :].reshape(M, ccat)
         for dy in range(3) for dx in range(3)], axis=-1)

    # Single MXU matmul: bf16 operands, f32 accumulation.
    gates = jax.lax.dot_general(
        patch, w_ref[...], (((1,), (0,)), ((), ())),
        preferred_element_type=jnp.float32) + b_ref[0]           # (M, 4*Chid) f32

    # Gate math in f32 (gate order i, f, o, g).
    i = jax.nn.sigmoid(gates[:, 0 * chid:1 * chid])
    f = jax.nn.sigmoid(gates[:, 1 * chid:2 * chid])
    o = jax.nn.sigmoid(gates[:, 2 * chid:3 * chid])
    g = jnp.tanh(gates[:, 3 * chid:4 * chid])

    c_prev = c_s[...].reshape(M, chid)
    c_next = f * c_prev + i * g
    h_next = o * jnp.tanh(c_next)

    c_s[...] = c_next.reshape(NB, H, W, chid)
    h_sp = h_next.reshape(NB, H, W, chid)
    h_s[...] = h_sp

    # Output block index is max(t - (p_pre-1), 0): during the encode phase the
    # block index stays 0 and only the value at t == p_pre-1 must survive, so
    # earlier encode steps skip the store entirely; each decode step writes its
    # own block (writeback happens once per block-index change).
    @pl.when(t >= p_pre - 1)
    def _emit():
        out_ref[0] = h_sp.astype(out_ref.dtype)


# ----------------------------- ConvLSTM forward ------------------------------ #
def convlstm_forward(feature, w_cat, b_cat, p_pre, p_post, n_batch_blocks=1):
    """LSTM recurrence of ConvLSTM.forward (post-encoder, pre-decoder).

    feature: (N, T_in, C, Hf, Wf) float32 (PyTorch NCHW convention per step).
    w_cat  : (3, 3, Cin+Chid, 4*Chid) fused HWIO conv weights, x-channels first.
    b_cat  : (4*Chid,) fused bias.
    returns: (N, p_post, Chid, Hf, Wf) hidden-state outputs.
    """
    N, T_in, C, Hf, Wf = feature.shape
    assert T_in == p_pre, f"T_in {T_in} mismatch p_pre {p_pre}"
    chid = w_cat.shape[-1] // 4
    cin = w_cat.shape[2] - chid
    assert cin == C and chid == C, "module has input_dim == hidden_dim"
    assert N % n_batch_blocks == 0
    NB = N // n_batch_blocks
    ccat = cin + chid
    t_total = p_pre + p_post - 1

    # (N, T, C, H, W) -> (T, N, H, W, C); bf16 halves the per-step input DMA.
    feat = jnp.transpose(feature, (1, 0, 3, 4, 2)).astype(jnp.bfloat16)
    w_flat = w_cat.reshape(9 * ccat, 4 * chid).astype(jnp.bfloat16)
    bias = b_cat.reshape(1, 4 * chid).astype(jnp.float32)

    kernel = functools.partial(_convlstm_kernel, p_pre=p_pre, cin=cin, chid=chid)

    out = pl.pallas_call(
        kernel,
        out_shape=jax.ShapeDtypeStruct((p_post, N, Hf, Wf, chid), jnp.float32),
        grid=(n_batch_blocks, t_total),
        in_specs=[
            # Encoder feature for step t (clamped during decode -> same block
            # index -> no extra DMA traffic in the decode phase).
            pl.BlockSpec((1, NB, Hf, Wf, cin),
                         lambda b, t: (jnp.minimum(t, p_pre - 1), b, 0, 0, 0)),
            # Weights / bias: constant block index -> loaded once per sequence.
            pl.BlockSpec((9 * ccat, 4 * chid), lambda b, t: (0, 0)),
            pl.BlockSpec((1, 4 * chid), lambda b, t: (0, 0)),
        ],
        out_specs=pl.BlockSpec(
            (1, NB, Hf, Wf, chid),
            lambda b, t: (jnp.maximum(t - (p_pre - 1), 0), b, 0, 0, 0)),
        scratch_shapes=[
            pltpu.VMEM((NB, Hf, Wf, chid), jnp.float32),            # h state
            pltpu.VMEM((NB, Hf, Wf, chid), jnp.float32),            # c state
            pltpu.VMEM((NB, Hf + 2, Wf + 2, ccat), jnp.bfloat16),   # padded [x|h]
        ],
        compiler_params=pltpu.CompilerParams(
            dimension_semantics=("parallel", "arbitrary")),
    )(feat, w_flat, bias)

    # (p_post, N, H, W, C) -> (N, p_post, C, H, W)
    return jnp.transpose(out, (1, 0, 4, 2, 3))


# ------------------------------ parameters ----------------------------------- #
def init_convlstm_cell_params(key, input_dim, hidden_dim):
    """Deterministic init matching nn.Conv2d shapes (OIHW weights, per-conv bias)."""
    k1, k2, k3, k4 = jax.random.split(key, 4)
    bi = 1.0 / (input_dim * 9) ** 0.5
    bh = 1.0 / (hidden_dim * 9) ** 0.5
    w_in = jax.random.uniform(k1, (4 * hidden_dim, input_dim, 3, 3),
                              jnp.float32, -bi, bi)
    b_in = jax.random.uniform(k2, (4 * hidden_dim,), jnp.float32, -bi, bi)
    w_h = jax.random.uniform(k3, (4 * hidden_dim, hidden_dim, 3, 3),
                             jnp.float32, -bh, bh)
    b_h = jax.random.uniform(k4, (4 * hidden_dim,), jnp.float32, -bh, bh)

    # Fuse: conv_x(x) + conv_h(h) == conv([x;h]) with concatenated weights.
    w_in_hwio = jnp.transpose(w_in, (2, 3, 1, 0))   # (3,3,Cin,4*Chid)
    w_h_hwio = jnp.transpose(w_h, (2, 3, 1, 0))     # (3,3,Chid,4*Chid)
    w_cat = jnp.concatenate([w_in_hwio, w_h_hwio], axis=2)
    b_cat = b_in + b_h
    return w_cat, b_cat


# ------------------------------ pure-JAX reference --------------------------- #
# Uses the same bf16 operand quantization (f32 accumulation) as the kernel so the
# comparison tolerance can be tight enough to catch indexing / layout bugs.
def _ref_cell(x, h, c, w_cat, b_cat, chid):
    xh = jnp.concatenate([x, h], axis=-1).astype(jnp.bfloat16)
    gates = jax.lax.conv_general_dilated(
        xh, w_cat.astype(jnp.bfloat16), (1, 1), "SAME",
        dimension_numbers=("NHWC", "HWIO", "NHWC"),
        preferred_element_type=jnp.float32) + b_cat
    i = jax.nn.sigmoid(gates[..., 0 * chid:1 * chid])
    f = jax.nn.sigmoid(gates[..., 1 * chid:2 * chid])
    o = jax.nn.sigmoid(gates[..., 2 * chid:3 * chid])
    g = jnp.tanh(gates[..., 3 * chid:4 * chid])
    c_next = f * c + i * g
    h_next = o * jnp.tanh(c_next)
    return h_next, c_next


def convlstm_forward_ref(feature, w_cat, b_cat, p_pre, p_post):
    N, T_in, C, Hf, Wf = feature.shape
    feat = jnp.transpose(feature, (0, 1, 3, 4, 2))
    h = jnp.zeros((N, Hf, Wf, C), jnp.float32)
    c = jnp.zeros((N, Hf, Wf, C), jnp.float32)
    outs = []
    for t in range(p_pre):
        h, c = _ref_cell(feat[:, t], h, c, w_cat, b_cat, C)
    outs.append(h)
    for _ in range(p_post - 1):
        h, c = _ref_cell(h, h, c, w_cat, b_cat, C)
        outs.append(h)
    out = jnp.stack(outs, axis=1)
    return jnp.transpose(out, (0, 1, 4, 2, 3))


# ------------------------------------ main ----------------------------------- #
if __name__ == "__main__":
    # Small shapes consistent with the module: the LSTM cell operates on encoder
    # features (N, T_in, C=encoder.out_channels, Hf, Wf) with kernel_size=(3,3).
    N, p_pre, p_post = 2, 4, 3
    C, Hf, Wf = 32, 8, 8           # hidden_dim == input_dim == encoder.out_channels

    key = jax.random.PRNGKey(0)
    k_feat, k_params = jax.random.split(key)
    feature = jax.random.normal(k_feat, (N, p_pre, C, Hf, Wf), jnp.float32)
    w_cat, b_cat = init_convlstm_cell_params(k_params, C, C)

    fwd = jax.jit(functools.partial(convlstm_forward, p_pre=p_pre, p_post=p_post))
    out = jax.block_until_ready(fwd(feature, w_cat, b_cat))
    assert out.shape == (N, p_post, C, Hf, Wf)

    # Numerical check vs. a bf16-matched pure-JAX reference (tight tolerance:
    # both paths quantize operands to bf16 and accumulate in f32).
    ref = convlstm_forward_ref(feature, w_cat, b_cat, p_pre, p_post)
    err = float(jnp.max(jnp.abs(out - ref)))
    assert jnp.allclose(out, ref, atol=5e-3, rtol=5e-3), err

    print("KERNEL_OK")
</pallas_src>

<mosaic_0001>
module attributes {stable_mosaic.version = 11 : i64} {
  func.func @_convlstm_kernel(%arg0: i32, %arg1: i32, %arg2: memref<1x2x8x8x32xbf16, #tpu.memory_space<vmem>>, %arg3: memref<576x128xbf16, #tpu.memory_space<vmem>>, %arg4: memref<1x128xf32, #tpu.memory_space<vmem>>, %arg5: memref<1x2x8x8x32xf32, #tpu.memory_space<vmem>>, %arg6: memref<2x8x8x32xf32, #tpu.memory_space<vmem>>, %arg7: memref<2x8x8x32xf32, #tpu.memory_space<vmem>>, %arg8: memref<2x10x10x64xbf16, #tpu.memory_space<vmem>>) attributes {dimension_semantics = [#tpu.dimension_semantics<parallel>, #tpu.dimension_semantics<arbitrary>], iteration_bounds = array<i64: 1, 6>, scalar_prefetch = 0 : i64, scratch_operands = 3 : i64, tpu.core_type = #tpu.core_type<tc>, window_params = [{transform_indices = @transform_0, window_bounds = array<i64: 1, 2, 8, 8, 32>}, {pipeline_mode = #tpu.pipeline_mode<synchronous>, transform_indices = @transform_1, window_bounds = array<i64: 576, 128>}, {pipeline_mode = #tpu.pipeline_mode<synchronous>, transform_indices = @transform_2, window_bounds = array<i64: 1, 128>}, {transform_indices = @transform_3, window_bounds = array<i64: 1, 2, 8, 8, 32>}]} {
    %c0_i32 = arith.constant 0 : i32
    %0 = arith.cmpi eq, %arg1, %c0_i32 : i32
    %1 = arith.extui %0 : i1 to i32
    %c0_i32_0 = arith.constant 0 : i32
    %2 = arith.cmpi ne, %1, %c0_i32_0 : i32
    scf.if %2 {
      %cst_33 = arith.constant 0.000000e+00 : f32
      %73 = vector.broadcast %cst_33 : f32 to vector<2x8x8x32xf32>
      %c0_34 = arith.constant 0 : index
      %c0_35 = arith.constant 0 : index
      %c0_36 = arith.constant 0 : index
      %c0_37 = arith.constant 0 : index
      %74 = vector.load %arg6[%c0_34, %c0_35, %c0_36, %c0_37] : memref<2x8x8x32xf32, #tpu.memory_space<vmem>>, vector<2x8x8x32xf32>
      tpu.vector_store %arg6[%c0_34, %c0_35, %c0_36, %c0_37], %73 {strides = array<i32>} : memref<2x8x8x32xf32, #tpu.memory_space<vmem>>, vector<2x8x8x32xf32>,
      %cst_38 = arith.constant 0.000000e+00 : f32
      %75 = vector.broadcast %cst_38 : f32 to vector<2x8x8x32xf32>
      %c0_39 = arith.constant 0 : index
      %c0_40 = arith.constant 0 : index
      %c0_41 = arith.constant 0 : index
      %c0_42 = arith.constant 0 : index
      %76 = vector.load %arg7[%c0_39, %c0_40, %c0_41, %c0_42] : memref<2x8x8x32xf32, #tpu.memory_space<vmem>>, vector<2x8x8x32xf32>
      tpu.vector_store %arg7[%c0_39, %c0_40, %c0_41, %c0_42], %75 {strides = array<i32>} : memref<2x8x8x32xf32, #tpu.memory_space<vmem>>, vector<2x8x8x32xf32>,
      %cst_43 = arith.constant 0.000000e+00 : bf16
      %77 = vector.broadcast %cst_43 : bf16 to vector<2x10x10x64xbf16>
      %c0_44 = arith.constant 0 : index
      %c0_45 = arith.constant 0 : index
      %c0_46 = arith.constant 0 : index
      %c0_47 = arith.constant 0 : index
      %78 = vector.load %arg8[%c0_44, %c0_45, %c0_46, %c0_47] : memref<2x10x10x64xbf16, #tpu.memory_space<vmem>>, vector<2x10x10x64xbf16>
      tpu.vector_store %arg8[%c0_44, %c0_45, %c0_46, %c0_47], %77 {strides = array<i32>} : memref<2x10x10x64xbf16, #tpu.memory_space<vmem>>, vector<2x10x10x64xbf16>,
    } else {
    }
    %c0 = arith.constant 0 : index
    %c0_1 = arith.constant 0 : index
    %c0_2 = arith.constant 0 : index
    %c0_3 = arith.constant 0 : index
    %3 = vector.load %arg6[%c0, %c0_1, %c0_2, %c0_3] : memref<2x8x8x32xf32, #tpu.memory_space<vmem>>, vector<2x8x8x32xf32>
    %4 = arith.truncf %3 : vector<2x8x8x32xf32> to vector<2x8x8x32xbf16>
    %c0_4 = arith.constant 0 : index
    %c1 = arith.constant 1 : index
    %c1_5 = arith.constant 1 : index
    %c32 = arith.constant 32 : index
    %5 = vector.load %arg8[%c0_4, %c1, %c1_5, %c32] : memref<2x10x10x64xbf16, #tpu.memory_space<vmem>>, vector<2x8x8x32xbf16>
    tpu.vector_store %arg8[%c0_4, %c1, %c1_5, %c32], %4 {strides = array<i32>} : memref<2x10x10x64xbf16, #tpu.memory_space<vmem>>, vector<2x8x8x32xbf16>,
    %c4_i32 = arith.constant 4 : i32
    %6 = arith.cmpi slt, %arg1, %c4_i32 : i32
    %7 = arith.extui %6 : i1 to i32
    %c0_i32_6 = arith.constant 0 : i32
    %8 = arith.cmpi ne, %7, %c0_i32_6 : i32
    scf.if %8 {
      %c0_33 = arith.constant 0 : index
      %c0_34 = arith.constant 0 : index
      %c0_35 = arith.constant 0 : index
      %c0_36 = arith.constant 0 : index
      %c0_37 = arith.constant 0 : index
      %73 = vector.load %arg2[%c0_33, %c0_34, %c0_35, %c0_36, %c0_37] : memref<1x2x8x8x32xbf16, #tpu.memory_space<vmem>>, vector<1x2x8x8x32xbf16>
      %74 = vector.shape_cast %73 : vector<1x2x8x8x32xbf16> to vector<2x8x8x32xbf16>
      %c0_38 = arith.constant 0 : index
      %c1_39 = arith.constant 1 : index
      %c1_40 = arith.constant 1 : index
      %c0_41 = arith.constant 0 : index
      %75 = vector.load %arg8[%c0_38, %c1_39, %c1_40, %c0_41] : memref<2x10x10x64xbf16, #tpu.memory_space<vmem>>, vector<2x8x8x32xbf16>
      tpu.vector_store %arg8[%c0_38, %c1_39, %c1_40, %c0_41], %74 {strides = array<i32>} : memref<2x10x10x64xbf16, #tpu.memory_space<vmem>>, vector<2x8x8x32xbf16>,
    } else {
    }
    %c4_i32_7 = arith.constant 4 : i32
    %9 = arith.cmpi sge, %arg1, %c4_i32_7 : i32
    %10 = arith.extui %9 : i1 to i32
    %c0_i32_8 = arith.constant 0 : i32
    %11 = arith.cmpi ne, %10, %c0_i32_8 : i32
    scf.if %11 {
      %73 = arith.truncf %3 : vector<2x8x8x32xf32> to vector<2x8x8x32xbf16>
      %c0_33 = arith.constant 0 : index
      %c1_34 = arith.constant 1 : index
      %c1_35 = arith.constant 1 : index
      %c0_36 = arith.constant 0 : index
      %74 = vector.load %arg8[%c0_33, %c1_34, %c1_35, %c0_36] : memref<2x10x10x64xbf16, #tpu.memory_space<vmem>>, vector<2x8x8x32xbf16>
      tpu.vector_store %arg8[%c0_33, %c1_34, %c1_35, %c0_36], %73 {strides = array<i32>} : memref<2x10x10x64xbf16, #tpu.memory_space<vmem>>, vector<2x8x8x32xbf16>,
    } else {
    }
    %c0_9 = arith.constant 0 : index
    %c0_10 = arith.constant 0 : index
    %c0_11 = arith.constant 0 : index
    %c0_12 = arith.constant 0 : index
    %12 = vector.load %arg8[%c0_9, %c0_10, %c0_11, %c0_12] : memref<2x10x10x64xbf16, #tpu.memory_space<vmem>>, vector<2x10x10x64xbf16>
    %13 = vector.extract_strided_slice %12 {offsets = [0, 0, 0, 0], sizes = [2, 8, 8, 64], strides = [1, 1, 1, 1]} : vector<2x10x10x64xbf16> to vector<2x8x8x64xbf16>
    %14 = vector.shape_cast %13 : vector<2x8x8x64xbf16> to vector<128x64xbf16>
    %15 = vector.extract_strided_slice %12 {offsets = [0, 0, 1, 0], sizes = [2, 8, 8, 64], strides = [1, 1, 1, 1]} : vector<2x10x10x64xbf16> to vector<2x8x8x64xbf16>
    %16 = vector.shape_cast %15 : vector<2x8x8x64xbf16> to vector<128x64xbf16>
    %17 = vector.extract_strided_slice %12 {offsets = [0, 0, 2, 0], sizes = [2, 8, 8, 64], strides = [1, 1, 1, 1]} : vector<2x10x10x64xbf16> to vector<2x8x8x64xbf16>
    %18 = vector.shape_cast %17 : vector<2x8x8x64xbf16> to vector<128x64xbf16>
    %19 = vector.extract_strided_slice %12 {offsets = [0, 1, 0, 0], sizes = [2, 8, 8, 64], strides = [1, 1, 1, 1]} : vector<2x10x10x64xbf16> to vector<2x8x8x64xbf16>
    %20 = vector.shape_cast %19 : vector<2x8x8x64xbf16> to vector<128x64xbf16>
    %21 = vector.extract_strided_slice %12 {offsets = [0, 1, 1, 0], sizes = [2, 8, 8, 64], strides = [1, 1, 1, 1]} : vector<2x10x10x64xbf16> to vector<2x8x8x64xbf16>
    %22 = vector.shape_cast %21 : vector<2x8x8x64xbf16> to vector<128x64xbf16>
    %23 = vector.extract_strided_slice %12 {offsets = [0, 1, 2, 0], sizes = [2, 8, 8, 64], strides = [1, 1, 1, 1]} : vector<2x10x10x64xbf16> to vector<2x8x8x64xbf16>
    %24 = vector.shape_cast %23 : vector<2x8x8x64xbf16> to vector<128x64xbf16>
    %25 = vector.extract_strided_slice %12 {offsets = [0, 2, 0, 0], sizes = [2, 8, 8, 64], strides = [1, 1, 1, 1]} : vector<2x10x10x64xbf16> to vector<2x8x8x64xbf16>
    %26 = vector.shape_cast %25 : vector<2x8x8x64xbf16> to vector<128x64xbf16>
    %27 = vector.extract_strided_slice %12 {offsets = [0, 2, 1, 0], sizes = [2, 8, 8, 64], strides = [1, 1, 1, 1]} : vector<2x10x10x64xbf16> to vector<2x8x8x64xbf16>
    %28 = vector.shape_cast %27 : vector<2x8x8x64xbf16> to vector<128x64xbf16>
    %29 = vector.extract_strided_slice %12 {offsets = [0, 2, 2, 0], sizes = [2, 8, 8, 64], strides = [1, 1, 1, 1]} : vector<2x10x10x64xbf16> to vector<2x8x8x64xbf16>
    %30 = vector.shape_cast %29 : vector<2x8x8x64xbf16> to vector<128x64xbf16>
    %31 = tpu.concatenate %14, %16, %18, %20, %22, %24, %26, %28, %30 in 1 : vector<128x64xbf16>, vector<128x64xbf16>, vector<128x64xbf16>, vector<128x64xbf16>, vector<128x64xbf16>, vector<128x64xbf16>, vector<128x64xbf16>, vector<128x64xbf16>, vector<128x64xbf16> -> vector<128x576xbf16>
    %c0_13 = arith.constant 0 : index
    %c0_14 = arith.constant 0 : index
    %32 = vector.load %arg3[%c0_13, %c0_14] : memref<576x128xbf16, #tpu.memory_space<vmem>>, vector<576x128xbf16>
    %cst = arith.constant dense<0.000000e+00> : vector<128x128xf32>
    %33 = tpu.matmul %31, %32, %cst {dimension_numbers = #tpu.dot_dimension_numbers<[1], [0], [0], [1], [0, 0, 1, 1], [], []>} : vector<128x576xbf16>, vector<576x128xbf16>, vector<128x128xf32> -> vector<128x128xf32>
    %c0_15 = arith.constant 0 : index
    %c0_16 = arith.constant 0 : index
    %34 = vector.load %arg4[%c0_15, %c0_16] : memref<1x128xf32, #tpu.memory_space<vmem>>, vector<1x128xf32>
    %35 = vector.shape_cast %34 : vector<1x128xf32> to vector<128xf32>
    %36 = vector.shape_cast %35 : vector<128xf32> to vector<1x128xf32>
    %37 = vector.broadcast %36 : vector<1x128xf32> to vector<128x128xf32>
    %38 = arith.addf %33, %37 : vector<128x128xf32>
    %39 = vector.extract_strided_slice %38 {offsets = [0, 0], sizes = [128, 32], strides = [1, 1]} : vector<128x128xf32> to vector<128x32xf32>
    %40 = arith.negf %39 : vector<128x32xf32>
    %41 = math.exp %40 : vector<128x32xf32>
    %cst_17 = arith.constant 1.000000e+00 : f32
    %42 = vector.broadcast %cst_17 : f32 to vector<128x32xf32>
    %43 = arith.addf %42, %41 : vector<128x32xf32>
    %44 = arith.divf %42, %43 : vector<128x32xf32>
    %45 = vector.extract_strided_slice %38 {offsets = [0, 32], sizes = [128, 32], strides = [1, 1]} : vector<128x128xf32> to vector<128x32xf32>
    %46 = arith.negf %45 : vector<128x32xf32>
    %47 = math.exp %46 : vector<128x32xf32>
    %cst_18 = arith.constant 1.000000e+00 : f32
    %48 = vector.broadcast %cst_18 : f32 to vector<128x32xf32>
    %49 = arith.addf %48, %47 : vector<128x32xf32>
    %50 = arith.divf %48, %49 : vector<128x32xf32>
    %51 = vector.extract_strided_slice %38 {offsets = [0, 64], sizes = [128, 32], strides = [1, 1]} : vector<128x128xf32> to vector<128x32xf32>
    %52 = arith.negf %51 : vector<128x32xf32>
    %53 = math.exp %52 : vector<128x32xf32>
    %cst_19 = arith.constant 1.000000e+00 : f32
    %54 = vector.broadcast %cst_19 : f32 to vector<128x32xf32>
    %55 = arith.addf %54, %53 : vector<128x32xf32>
    %56 = arith.divf %54, %55 : vector<128x32xf32>
    %57 = vector.extract_strided_slice %38 {offsets = [0, 96], sizes = [128, 32], strides = [1, 1]} : vector<128x128xf32> to vector<128x32xf32>
    %58 = math.tanh %57 : vector<128x32xf32>
    %c0_20 = arith.constant 0 : index
    %c0_21 = arith.constant 0 : index
    %c0_22 = arith.constant 0 : index
    %c0_23 = arith.constant 0 : index
    %59 = vector.load %arg7[%c0_20, %c0_21, %c0_22, %c0_23] : memref<2x8x8x32xf32, #tpu.memory_space<vmem>>, vector<2x8x8x32xf32>
    %60 = vector.shape_cast %59 : vector<2x8x8x32xf32> to vector<128x32xf32>
    %61 = arith.mulf %50, %60 : vector<128x32xf32>
    %62 = arith.mulf %44, %58 : vector<128x32xf32>
    %63 = arith.addf %61, %62 : vector<128x32xf32>
    %64 = math.tanh %63 : vector<128x32xf32>
    %65 = arith.mulf %56, %64 : vector<128x32xf32>
    %66 = vector.shape_cast %63 : vector<128x32xf32> to vector<2x8x8x32xf32>
    %c0_24 = arith.constant 0 : index
    %c0_25 = arith.constant 0 : index
    %c0_26 = arith.constant 0 : index
    %c0_27 = arith.constant 0 : index
    %67 = vector.load %arg7[%c0_24, %c0_25, %c0_26, %c0_27] : memref<2x8x8x32xf32, #tpu.memory_space<vmem>>, vector<2x8x8x32xf32>
    tpu.vector_store %arg7[%c0_24, %c0_25, %c0_26, %c0_27], %66 {strides = array<i32>} : memref<2x8x8x32xf32, #tpu.memory_space<vmem>>, vector<2x8x8x32xf32>,
    %68 = vector.shape_cast %65 : vector<128x32xf32> to vector<2x8x8x32xf32>
    %c0_28 = arith.constant 0 : index
    %c0_29 = arith.constant 0 : index
    %c0_30 = arith.constant 0 : index
    %c0_31 = arith.constant 0 : index
    %69 = vector.load %arg6[%c0_28, %c0_29, %c0_30, %c0_31] : memref<2x8x8x32xf32, #tpu.memory_space<vmem>>, vector<2x8x8x32xf32>
    tpu.vector_store %arg6[%c0_28, %c0_29, %c0_30, %c0_31], %68 {strides = array<i32>} : memref<2x8x8x32xf32, #tpu.memory_space<vmem>>, vector<2x8x8x32xf32>,
    %c3_i32 = arith.constant 3 : i32
    %70 = arith.cmpi sge, %arg1, %c3_i32 : i32
    %71 = arith.extui %70 : i1 to i32
    %c0_i32_32 = arith.constant 0 : i32
    %72 = arith.cmpi ne, %71, %c0_i32_32 : i32
    scf.if %72 {
      %c0_33 = arith.constant 0 : index
      %c0_34 = arith.constant 0 : index
      %c0_35 = arith.constant 0 : index
      %c0_36 = arith.constant 0 : index
      %c0_37 = arith.constant 0 : index
      %73 = vector.load %arg5[%c0_33, %c0_34, %c0_35, %c0_36, %c0_37] : memref<1x2x8x8x32xf32, #tpu.memory_space<vmem>>, vector<1x2x8x8x32xf32>
      %74 = vector.shape_cast %73 : vector<1x2x8x8x32xf32> to vector<2x8x8x32xf32>
      %75 = vector.shape_cast %68 : vector<2x8x8x32xf32> to vector<1x2x8x8x32xf32>
      tpu.vector_store %arg5[%c0_33, %c0_34, %c0_35, %c0_36, %c0_37], %75 {strides = array<i32>} : memref<1x2x8x8x32xf32, #tpu.memory_space<vmem>>, vector<1x2x8x8x32xf32>,
    } else {
    }
    return
  }
  func.func @transform_0(%arg0: i32, %arg1: i32) -> (i32, i32, i32, i32, i32) {
    %c3_i32 = arith.constant 3 : i32
    %0 = arith.minsi %arg1, %c3_i32 : i32
    %c0_i32 = arith.constant 0 : i32
    %c0_i32_0 = arith.constant 0 : i32
    %c0_i32_1 = arith.constant 0 : i32
    %c0_i32_2 = arith.constant 0 : i32
    return %0, %arg0, %c0_i32, %c0_i32_0, %c0_i32_1 : i32, i32, i32, i32, i32
  }
  func.func @transform_1(%arg0: i32, %arg1: i32) -> (i32, i32) {
    %c0_i32 = arith.constant 0 : i32
    %c0_i32_0 = arith.constant 0 : i32
    %c0_i32_1 = arith.constant 0 : i32
    return %c0_i32, %c0_i32_0 : i32, i32
  }
  func.func @transform_2(%arg0: i32, %arg1: i32) -> (i32, i32) {
    %c0_i32 = arith.constant 0 : i32
    %c0_i32_0 = arith.constant 0 : i32
    %c0_i32_1 = arith.constant 0 : i32
    return %c0_i32, %c0_i32_0 : i32, i32
  }
  func.func @transform_3(%arg0: i32, %arg1: i32) -> (i32, i32, i32, i32, i32) {
    %c3_i32 = arith.constant 3 : i32
    %0 = arith.subi %arg1, %c3_i32 : i32
    %c0_i32 = arith.constant 0 : i32
    %1 = arith.maxsi %0, %c0_i32 : i32
    %c0_i32_0 = arith.constant 0 : i32
    %c0_i32_1 = arith.constant 0 : i32
    %c0_i32_2 = arith.constant 0 : i32
    %c0_i32_3 = arith.constant 0 : i32
    return %1, %arg0, %c0_i32_0, %c0_i32_1, %c0_i32_2 : i32, i32, i32, i32, i32
  }
}

</mosaic_0001>

<llo_original>
// kernel: convlstm_forward.1
$region0: #{convlstm_forward.1}
  #allocation0 [shape = 'u32[]', space=smem, size = 0x4, offset = 0x4, fixed_abs, tag = 'smem constant byte address 0x4 - core index']
  #allocation1 [shape = 'u32[72,128]{1,0:T(1,128)}', space=vmem, size = 0x9000, scoped, tag = 'internal scratch']
  #allocation2 [shape = 'f32[2,8,8,32]{3,2,1,0:T(8,128)}', space=vmem, size = 0x10000, scoped, tag = 'scratch operand']
  #allocation3 [shape = 'f32[2,8,8,32]{3,2,1,0:T(8,128)}', space=vmem, size = 0x10000, scoped, tag = 'scratch operand']
  #allocation4 [shape = 'bf16[2,10,10,64]{3,2,1,0:T(8,128)(2,1)}', space=vmem, size = 0x14000, scoped, tag = 'scratch operand']
  %s0 = inlined_call_operand.vmem [shape: bf16[4,2,8,8,32], index: 0, kind: input, shape index: {}]
  %s1 = inlined_call_operand.vmem [shape: bf16[576,128], index: 1, kind: input, shape index: {}]
  %s2 = inlined_call_operand.vmem [shape: f32[1,128], index: 2, kind: input, shape index: {}]
  %s3 = inlined_call_operand.vmem [shape: f32[3,2,8,8,32], index: 3, kind: output, shape index: {}]
  %s4 = sld [smem:[#allocation0]]
  $region61: #{convlstm_forward.1} parent=0
    _
  %s6 = ssub.s32 1, %s4
  %s7 = scalar_select 0, %s6, %s4
  loop: start=0, step=1, limit=8
  $region2: #{convlstm_forward.1} parent=0 // loop_pre_header
    _
  $region3: #{convlstm_forward.1} parent=0 // loop_header
    %s9 = sphi 0, %s13
    %p10 = scmp.ge.s32.totalorder %s9, 8
    %s16 = sphi 0, %s28
    %s17 = sphi 0, %s24
    %s18 = sphi 0, %s16
    %s19 = sphi 0, %s17
    %s20 = sphi 0, %s18
    %s21 = sphi 0, %s19
    %s37 = sphi 0, %s39
    %s40 = sphi 0, %s37
    %s41 = sphi 0, %s40
    %s57 = sphi 0, %s41
    %s61 = sphi 0, %s61
    %s63 = sphi 0, %s61
    %s64 = sphi 0, %s63
    %s78 = sphi 0, %s64
    %s82 = sphi 0, %s82
    %s84 = sphi 0, %s82
    %s85 = sphi 0, %s84
    %s99 = sphi 0, %s85
    %s113 = sphi 0, %s115
    %s116 = sphi 0, %s113
    %s117 = sphi 0, %s116
    %s133 = sphi 0, %s117
  $region4: #{convlstm_forward.1} parent=0 // loop_header_branch
    %12 = sbr.rel (%p10) target = $region8
  $region5: #{convlstm_forward.1} parent=0 // loop_body
    %s14 = ssub.s32 %s9, 1
    %s15 = ssub.s32 %s9, 2
    %s22 = sadd.s32 1, %s17
    %p23 = scmp.ge.s32.totalorder %s22, 6
    %s24 = scalar_select %p23, 0, %s22
    %s25 = sadd.s32 1, %s16
    %s26 = scalar_select %p23, %s25, %s16
    %p27 = scmp.ge.s32.totalorder %s26, 1
    %s28 = scalar_select %p27, 0, %s26
    %p29 = scmp.lt.s32.totalorder %s17, 3
    %s30 = scalar_select %p29, %s17, 3
    %p31 = scmp.lt.s32.totalorder %s24, 3
    %s32 = scalar_select %p31, %s24, 3
    %s33 = ssub.s32 %s30, %s32
    %s34 = ssub.s32 %s16, %s28
    %s35 = sor.u32 %s33, %s34
    %p36 = scmp.eq.s32.totalorder %s35, 0
    %s38 = sadd.s32 %s37, 1
    %s39 = scalar_select %p36, %s37, %s38
    %p42 = pneg %p36
    %p43 = scmp.eq.s32.totalorder %s9, 5
    %p44 = por %p42, %p43
    %p45 = scmp.ne.s32.totalorder %s37, %s40
    %p46 = scmp.eq.s32.totalorder %s9, 0
    %p47 = por %p45, %p46
    %p48 = scmp.ne.s32.totalorder %s37, %s40
    %p49 = scmp.eq.s32.totalorder %s14, 5
    %p50 = por %p48, %p49
    %p51 = scmp.ne.s32.totalorder %s40, %s41
    %p52 = scmp.eq.s32.totalorder %s14, 0
    %p53 = por %p51, %p52
    %p54 = scmp.ne.s32.totalorder %s40, %s41
    %p55 = scmp.eq.s32.totalorder %s15, 5
    %p56 = por %p54, %p55
    %p58 = scmp.ne.s32.totalorder %s41, %s57
    %p59 = scmp.eq.s32.totalorder %s15, 0
    %p60 = por %p58, %p59
    %s62 = sadd.s32 %s61, 1
    %p65 = scmp.eq.s32.totalorder %s9, 5
    %p66 = scmp.ne.s32.totalorder %s61, %s63
    %p67 = scmp.eq.s32.totalorder %s9, 0
    %p68 = por %p66, %p67
    %p69 = scmp.ne.s32.totalorder %s61, %s63
    %p70 = scmp.eq.s32.totalorder %s14, 5
    %p71 = por %p69, %p70
    %p72 = scmp.ne.s32.totalorder %s63, %s64
    %p73 = scmp.eq.s32.totalorder %s14, 0
    %p74 = por %p72, %p73
    %p75 = scmp.ne.s32.totalorder %s63, %s64
    %p76 = scmp.eq.s32.totalorder %s15, 5
    %p77 = por %p75, %p76
    %p79 = scmp.ne.s32.totalorder %s64, %s78
    %p80 = scmp.eq.s32.totalorder %s15, 0
    %p81 = por %p79, %p80
    %s83 = sadd.s32 %s82, 1
    %p86 = scmp.eq.s32.totalorder %s9, 5
    %p87 = scmp.ne.s32.totalorder %s82, %s84
    %p88 = scmp.eq.s32.totalorder %s9, 0
    %p89 = por %p87, %p88
    %p90 = scmp.ne.s32.totalorder %s82, %s84
    %p91 = scmp.eq.s32.totalorder %s14, 5
    %p92 = por %p90, %p91
    %p93 = scmp.ne.s32.totalorder %s84, %s85
    %p94 = scmp.eq.s32.totalorder %s14, 0
    %p95 = por %p93, %p94
    %p96 = scmp.ne.s32.totalorder %s84, %s85
    %p97 = scmp.eq.s32.totalorder %s15, 5
    %p98 = por %p96, %p97
    %p100 = scmp.ne.s32.totalorder %s85, %s99
    %p101 = scmp.eq.s32.totalorder %s15, 0
    %p102 = por %p100, %p101
    %s103 = ssub.s32 %s17, 3
    %p104 = scmp.gt.s32.totalorder %s103, 0
    %s105 = scalar_select %p104, %s103, 0
    %s106 = ssub.s32 %s24, 3
    %p107 = scmp.gt.s32.totalorder %s106, 0
    %s108 = scalar_select %p107, %s106, 0
    %s109 = ssub.s32 %s105, %s108
    %s110 = ssub.s32 %s16, %s28
    %s111 = sor.u32 %s109, %s110
    %p112 = scmp.eq.s32.totalorder %s111, 0
    %s114 = sadd.s32 %s113, 1
    %s115 = scalar_select %p112, %s113, %s114
    %p118 = pneg %p112
    %p119 = scmp.eq.s32.totalorder %s9, 5
    %p120 = por %p118, %p119
    %p121 = scmp.ne.s32.totalorder %s113, %s116
    %p122 = scmp.eq.s32.totalorder %s9, 0
    %p123 = por %p121, %p122
    %p124 = scmp.ne.s32.totalorder %s113, %s116
    %p125 = scmp.eq.s32.totalorder %s14, 5
    %p126 = por %p124, %p125
    %p127 = scmp.ne.s32.totalorder %s116, %s117
    %p128 = scmp.eq.s32.totalorder %s14, 0
    %p129 = por %p127, %p128
    %p130 = scmp.ne.s32.totalorder %s116, %s117
    %p131 = scmp.eq.s32.totalorder %s15, 5
    %p132 = por %p130, %p131
    %p134 = scmp.ne.s32.totalorder %s117, %s133
    %p135 = scmp.eq.s32.totalorder %s15, 0
    %p136 = por %p134, %p135
    %p137 = scmp.le.s32.totalorder 1, %s9
    %p138 = scmp.lt.s32.totalorder %s9, 7
    %p139 = pnand %p137, %p138
    %p140 = pneg %p139
    // Predicated region
    $region9: #{convlstm_forward.1} parent=5 // pred_check
      _
    $region10: #{convlstm_forward.1} parent=5 // pred_check_branch
      %142 = sbr.rel (%p139) target = $region12
    $region11: #{convlstm_forward.1} parent=5 // pred_region
      %s143 = ssub.s32 %s9, 1
      // Predicated region
      $region13: #{convlstm_forward.1} parent=11 // pred_check
        %p144 = pneg %p74
      $region14: #{convlstm_forward.1} parent=11 // pred_check_branch
        %146 = sbr.rel (%p144) target = $region16
      $region15: #{convlstm_forward.1} parent=11 // pred_region
        _
      $region16: #{convlstm_forward.1} parent=11 // pred_fallthru
        _
      // Predicated region
      $region17: #{convlstm_forward.1} parent=11 // pred_check
        %p147 = pneg %p95
      $region18: #{convlstm_forward.1} parent=11 // pred_check_branch
        %149 = sbr.rel (%p147) target = $region20
      $region19: #{convlstm_forward.1} parent=11 // pred_region
        _
      $region20: #{convlstm_forward.1} parent=11 // pred_fallthru
        _
    $region12: #{convlstm_forward.1} parent=5 // pred_fallthru
      _
    %p150 = scmp.lt.s32.totalorder %s9, 6
    // Predicated region
    $region21: #{convlstm_forward.1} parent=5 // pred_check
      %p151 = pneg %p150
    $region22: #{convlstm_forward.1} parent=5 // pred_check_branch
      %153 = sbr.rel (%p151) target = $region24
    $region23: #{convlstm_forward.1} parent=5 // pred_region
      // Predicated region
      $region25: #{convlstm_forward.1} parent=23 // pred_check
        %p154 = pneg %p47
      $region26: #{convlstm_forward.1} parent=23 // pred_check_branch
        %156 = sbr.rel (%p154) target = $region28
      $region27: #{convlstm_forward.1} parent=23 // pred_region
        %p157 = scmp.lt.s32.totalorder %s17, 3
        %s158 = scalar_select %p157, %s17, 3
        %s159 = smul.u32 2, %s16
        %p160 = scmp.lt.s32.totalorder %s158, 3
        %s161 = scalar_select %p160, %s158, 3
        %p162 = scmp.lt.s32.totalorder %s159, 1
        %s163 = scalar_select %p162, %s159, 1
        %s164 = smul.addr %s163, 8
        %s165 = smul.addr %s161, 16
        %s166 = sadd.s32 %s164, %s165
        %s167 = smul.addr %s166, 4
        %s168 = scalar_lea.vmem %s0, %s167
        %p169 = scmp.lt.s32.totalorder %s17, 3
        %s170 = scalar_select %p169, %s17, 3
        %s171 = smul.u32 2, %s16
      $region28: #{convlstm_forward.1} parent=23 // pred_fallthru
        _
    $region24: #{convlstm_forward.1} parent=5 // pred_fallthru
      _
    %p172 = scmp.le.s32.totalorder 1, %s9
    %p173 = scmp.lt.s32.totalorder %s9, 7
    %p174 = pnand %p172, %p173
    %p175 = pneg %p174
    // Predicated region
    $region29: #{convlstm_forward.1} parent=5 // pred_check
      _
    $region30: #{convlstm_forward.1} parent=5 // pred_check_branch
      %177 = sbr.rel (%p174) target = $region32
    $region31: #{convlstm_forward.1} parent=5 // pred_region
      %s178 = ssub.s32 %s9, 1
      %p179 = scmp.lt.s32.totalorder %s19, 3
      %s180 = scalar_select %p179, %s19, 3
      %s181 = smul.u32 2, %s18
      %p182 = scmp.lt.s32.totalorder %s180, 3
      %s183 = scalar_select %p182, %s180, 3
      %p184 = scmp.lt.s32.totalorder %s181, 1
      %s185 = scalar_select %p184, %s181, 1
      %s186 = smul.addr %s185, 8
      %s187 = smul.addr %s183, 16
      %s188 = sadd.s32 %s186, %s187
      %s189 = smul.addr %s188, 4
      %s190 = scalar_lea.vmem %s0, %s189
      %p191 = pneg %p53
      %p192 = pneg %p50
      %p193 = pneg %p74
      %p194 = pneg %p71
      %p195 = pneg %p95
      %p196 = pneg %p92
      %p197 = pneg %p129
      %p198 = pneg %p126
      %s199 = ssub.s32 %s19, 3
      %p200 = scmp.gt.s32.totalorder %s199, 0
      %s201 = scalar_select %p200, %s199, 0
      %s202 = smul.u32 2, %s18
      %p203 = scmp.lt.s32.totalorder %s201, 2
      %s204 = scalar_select %p203, %s201, 2
      %p205 = scmp.lt.s32.totalorder %s202, 1
      %s206 = scalar_select %p205, %s202, 1
      %s207 = smul.addr %s206, 8
      %s208 = smul.addr %s204, 16
      %s209 = sadd.s32 %s207, %s208
      %s210 = smul.addr %s209, 8
      %s211 = scalar_lea.vmem %s3, %s210
      %p212 = scmp.lt.s32.totalorder %s19, 3
      %s213 = scalar_select %p212, %s19, 3
      %s214 = smul.u32 2, %s18
      %p215 = scmp.lt.s32.totalorder %s213, 3
      %s216 = scalar_select %p215, %s213, 3
      %p217 = scmp.lt.s32.totalorder %s214, 1
      %s218 = scalar_select %p217, %s214, 1
      %s219 = smul.addr %s218, 8
      %s220 = smul.addr %s216, 16
      %s221 = sadd.s32 %s219, %s220
      %s222 = smul.addr %s221, 4
      %s223 = scalar_lea.vmem %s0, %s222
      %p224 = scmp.lt.s32.totalorder %s19, 3
      %s225 = scalar_select %p224, %s19, 3
      %s226 = smul.u32 2, %s18
      %s227 = ssub.s32 %s19, 3
      %p228 = scmp.gt.s32.totalorder %s227, 0
      %s229 = scalar_select %p228, %s227, 0
      %s230 = smul.u32 2, %s18
      %p231 = scmp.lt.s32.totalorder %s229, 2
      %s232 = scalar_select %p231, %s229, 2
      %p233 = scmp.lt.s32.totalorder %s230, 1
      %s234 = scalar_select %p233, %s230, 1
      %s235 = smul.addr %s234, 8
      %s236 = smul.addr %s232, 16
      %s237 = sadd.s32 %s235, %s236
      %s238 = smul.addr %s237, 8
      %s239 = scalar_lea.vmem %s3, %s238
      %s240 = ssub.s32 %s19, 3
      %p241 = scmp.gt.s32.totalorder %s240, 0
      %s242 = scalar_select %p241, %s240, 0
      %s243 = smul.u32 2, %s18
      %p245 = scmp.eq.s32.totalorder %s19, 0
      // Predicated region
      $region33: #{convlstm_forward.1} parent=31 // pred_check
        %p246 = pneg %p245
      $region34: #{convlstm_forward.1} parent=31 // pred_check_branch
        %248 = sbr.rel (%p246) target = $region36
      $region35: #{convlstm_forward.1} parent=31 // pred_region
        %vm249 = vcmask 261120
        %250 = vst.msk [vmem:[#allocation2] sm:$0xff] %vm249, 0.0
        %251 = vst.msk [vmem:[#allocation2 + $0x8] sm:$0xff] %vm249, 0.0
        %252 = vst.msk [vmem:[#allocation2 + $0x10] sm:$0xff] %vm249, 0.0
        %253 = vst.msk [vmem:[#allocation2 + $0x18] sm:$0xff] %vm249, 0.0
        %254 = vst.msk [vmem:[#allocation2 + $0x20] sm:$0xff] %vm249, 0.0
        %255 = vst.msk [vmem:[#allocation2 + $0x28] sm:$0xff] %vm249, 0.0
        %256 = vst.msk [vmem:[#allocation2 + $0x30] sm:$0xff] %vm249, 0.0
        %257 = vst.msk [vmem:[#allocation2 + $0x38] sm:$0xff] %vm249, 0.0
        %258 = vst.msk [vmem:[#allocation2 + $0x40] sm:$0xff] %vm249, 0.0
        %259 = vst.msk [vmem:[#allocation2 + $0x48] sm:$0xff] %vm249, 0.0
        %260 = vst.msk [vmem:[#allocation2 + $0x50] sm:$0xff] %vm249, 0.0
        %261 = vst.msk [vmem:[#allocation2 + $0x58] sm:$0xff] %vm249, 0.0
        %262 = vst.msk [vmem:[#allocation2 + $0x60] sm:$0xff] %vm249, 0.0
        %263 = vst.msk [vmem:[#allocation2 + $0x68] sm:$0xff] %vm249, 0.0
        %264 = vst.msk [vmem:[#allocation2 + $0x70] sm:$0xff] %vm249, 0.0
        %265 = vst.msk [vmem:[#allocation2 + $0x78] sm:$0xff] %vm249, 0.0
        %266 = vst.msk [vmem:[#allocation3] sm:$0xff] %vm249, 0.0
        %267 = vst.msk [vmem:[#allocation3 + $0x8] sm:$0xff] %vm249, 0.0
        %268 = vst.msk [vmem:[#allocation3 + $0x10] sm:$0xff] %vm249, 0.0
        %269 = vst.msk [vmem:[#allocation3 + $0x18] sm:$0xff] %vm249, 0.0
        %270 = vst.msk [vmem:[#allocation3 + $0x20] sm:$0xff] %vm249, 0.0
        %271 = vst.msk [vmem:[#allocation3 + $0x28] sm:$0xff] %vm249, 0.0
        %272 = vst.msk [vmem:[#allocation3 + $0x30] sm:$0xff] %vm249, 0.0
        %273 = vst.msk [vmem:[#allocation3 + $0x38] sm:$0xff] %vm249, 0.0
        %274 = vst.msk [vmem:[#allocation3 + $0x40] sm:$0xff] %vm249, 0.0
        %275 = vst.msk [vmem:[#allocation3 + $0x48] sm:$0xff] %vm249, 0.0
        %276 = vst.msk [vmem:[#allocation3 + $0x50] sm:$0xff] %vm249, 0.0
        %277 = vst.msk [vmem:[#allocation3 + $0x58] sm:$0xff] %vm249, 0.0
        %278 = vst.msk [vmem:[#allocation3 + $0x60] sm:$0xff] %vm249, 0.0
        %279 = vst.msk [vmem:[#allocation3 + $0x68] sm:$0xff] %vm249, 0.0
        %280 = vst.msk [vmem:[#allocation3 + $0x70] sm:$0xff] %vm249, 0.0
        %281 = vst.msk [vmem:[#allocation3 + $0x78] sm:$0xff] %vm249, 0.0
        %vm282 = vcmask 519168
        %283 = vst.msk [vmem:[#allocation4] sm:$0xf] %vm282, 0
        %vm284 = vcmask 516096
        %285 = vst.msk [vmem:[#allocation4 + $0x4] sm:$0x1] %vm284, 0
        %286 = vst.msk [vmem:[#allocation4 + $0x8] sm:$0xf] %vm282, 0
        %287 = vst.msk [vmem:[#allocation4 + $0xc] sm:$0x1] %vm284, 0
        %288 = vst.msk [vmem:[#allocation4 + $0x10] sm:$0xf] %vm282, 0
        %289 = vst.msk [vmem:[#allocation4 + $0x14] sm:$0x1] %vm284, 0
        %290 = vst.msk [vmem:[#allocation4 + $0x18] sm:$0xf] %vm282, 0
        %291 = vst.msk [vmem:[#allocation4 + $0x1c] sm:$0x1] %vm284, 0
        %292 = vst.msk [vmem:[#allocation4 + $0x20] sm:$0xf] %vm282, 0
        %293 = vst.msk [vmem:[#allocation4 + $0x24] sm:$0x1] %vm284, 0
        %294 = vst.msk [vmem:[#allocation4 + $0x28] sm:$0xf] %vm282, 0
        %295 = vst.msk [vmem:[#allocation4 + $0x2c] sm:$0x1] %vm284, 0
        %296 = vst.msk [vmem:[#allocation4 + $0x30] sm:$0xf] %vm282, 0
        %297 = vst.msk [vmem:[#allocation4 + $0x34] sm:$0x1] %vm284, 0
        %298 = vst.msk [vmem:[#allocation4 + $0x38] sm:$0xf] %vm282, 0
        %299 = vst.msk [vmem:[#allocation4 + $0x3c] sm:$0x1] %vm284, 0
        %300 = vst.msk [vmem:[#allocation4 + $0x40] sm:$0xf] %vm282, 0
        %301 = vst.msk [vmem:[#allocation4 + $0x44] sm:$0x1] %vm284, 0
        %302 = vst.msk [vmem:[#allocation4 + $0x48] sm:$0xf] %vm282, 0
        %303 = vst.msk [vmem:[#allocation4 + $0x4c] sm:$0x1] %vm284, 0
        %304 = vst.msk [vmem:[#allocation4 + $0x50] sm:$0xf] %vm282, 0
        %305 = vst.msk [vmem:[#allocation4 + $0x54] sm:$0x1] %vm284, 0
        %306 = vst.msk [vmem:[#allocation4 + $0x58] sm:$0xf] %vm282, 0
        %307 = vst.msk [vmem:[#allocation4 + $0x5c] sm:$0x1] %vm284, 0
        %308 = vst.msk [vmem:[#allocation4 + $0x60] sm:$0xf] %vm282, 0
        %309 = vst.msk [vmem:[#allocation4 + $0x64] sm:$0x1] %vm284, 0
        %310 = vst.msk [vmem:[#allocation4 + $0x68] sm:$0xf] %vm282, 0
        %311 = vst.msk [vmem:[#allocation4 + $0x6c] sm:$0x1] %vm284, 0
        %312 = vst.msk [vmem:[#allocation4 + $0x70] sm:$0xf] %vm282, 0
        %313 = vst.msk [vmem:[#allocation4 + $0x74] sm:$0x1] %vm284, 0
        %314 = vst.msk [vmem:[#allocation4 + $0x78] sm:$0xf] %vm282, 0
        %315 = vst.msk [vmem:[#allocation4 + $0x7c] sm:$0x1] %vm284, 0
        %316 = vst.msk [vmem:[#allocation4 + $0x80] sm:$0xf] %vm282, 0
        %317 = vst.msk [vmem:[#allocation4 + $0x84] sm:$0x1] %vm284, 0
        %318 = vst.msk [vmem:[#allocation4 + $0x88] sm:$0xf] %vm282, 0
        %319 = vst.msk [vmem:[#allocation4 + $0x8c] sm:$0x1] %vm284, 0
        %320 = vst.msk [vmem:[#allocation4 + $0x90] sm:$0xf] %vm282, 0
        %321 = vst.msk [vmem:[#allocation4 + $0x94] sm:$0x1] %vm284, 0
        %322 = vst.msk [vmem:[#allocation4 + $0x98] sm:$0xf] %vm282, 0
        %323 = vst.msk [vmem:[#allocation4 + $0x9c] sm:$0x1] %vm284, 0
      $region36: #{convlstm_forward.1} parent=31 // pred_fallthru
        _
      %v324 = vld [vmem:[#allocation2] sm:$0xff]
      %v325 = vld [vmem:[#allocation2 + $0x8] sm:$0xff]
      %v326 = vld [vmem:[#allocation2 + $0x10] sm:$0xff]
      %v327 = vld [vmem:[#allocation2 + $0x18] sm:$0xff]
      %v328 = vld [vmem:[#allocation2 + $0x20] sm:$0xff]
      %v329 = vld [vmem:[#allocation2 + $0x28] sm:$0xff]
      %v330 = vld [vmem:[#allocation2 + $0x30] sm:$0xff]
      %v331 = vld [vmem:[#allocation2 + $0x38] sm:$0xff]
      %v332 = vld [vmem:[#allocation2 + $0x40] sm:$0xff]
      %v333 = vld [vmem:[#allocation2 + $0x48] sm:$0xff]
      %v334 = vld [vmem:[#allocation2 + $0x50] sm:$0xff]
      %v335 = vld [vmem:[#allocation2 + $0x58] sm:$0xff]
      %v336 = vld [vmem:[#allocation2 + $0x60] sm:$0xff]
      %v337 = vld [vmem:[#allocation2 + $0x68] sm:$0xff]
      %v338 = vld [vmem:[#allocation2 + $0x70] sm:$0xff]
      %v339 = vld [vmem:[#allocation2 + $0x78] sm:$0xff]
      %v340 = vpack.c.bf16 %v324, %v324
      %v341 = vpack.c.bf16 %v325, %v325
      %v342 = vpack.c.bf16 %v326, %v326
      %v343 = vpack.c.bf16 %v327, %v327
      %v344 = vpack.c.bf16 %v328, %v328
      %v345 = vpack.c.bf16 %v329, %v329
      %v346 = vpack.c.bf16 %v330, %v330
      %v347 = vpack.c.bf16 %v331, %v331
      %v348 = vpack.c.bf16 %v332, %v332
      %v349 = vpack.c.bf16 %v333, %v333
      %v350 = vpack.c.bf16 %v334, %v334
      %v351 = vpack.c.bf16 %v335, %v335
      %v352 = vpack.c.bf16 %v336, %v336
      %v353 = vpack.c.bf16 %v337, %v337
      %v354 = vpack.c.bf16 %v338, %v338
      %v355 = vpack.c.bf16 %v339, %v339
      %v357 = vshrl.u32 %v340, 16
      %v359 = vrot.slane %v357, 7
      %v360 = vshll.u32 %v340, 16
      %v362 = vor.u32 %v359, %v360
      %v363 = vrot.slane %v359, 4
      %v365 = vshrl.u32 %v341, 16
      %v367 = vrot.slane %v365, 7
      %v368 = vshll.u32 %v341, 16
      %v370 = vor.u32 %v367, %v368
      %v371 = vrot.slane %v367, 4
      %v373 = vshrl.u32 %v342, 16
      %v375 = vrot.slane %v373, 7
      %v376 = vshll.u32 %v342, 16
      %v378 = vor.u32 %v375, %v376
      %v379 = vrot.slane %v375, 4
      %v381 = vshrl.u32 %v343, 16
      %v383 = vrot.slane %v381, 7
      %v384 = vshll.u32 %v343, 16
      %v386 = vor.u32 %v383, %v384
      %v387 = vrot.slane %v383, 4
      %v389 = vshrl.u32 %v344, 16
      %v391 = vrot.slane %v389, 7
      %v392 = vshll.u32 %v344, 16
      %v394 = vor.u32 %v391, %v392
      %v395 = vrot.slane %v391, 4
      %v397 = vshrl.u32 %v345, 16
      %v399 = vrot.slane %v397, 7
      %v400 = vshll.u32 %v345, 16
      %v402 = vor.u32 %v399, %v400
      %v403 = vrot.slane %v399, 4
      %v405 = vshrl.u32 %v346, 16
      %v407 = vrot.slane %v405, 7
      %v408 = vshll.u32 %v346, 16
      %v410 = vor.u32 %v407, %v408
      %v411 = vrot.slane %v407, 4
      %v413 = vshrl.u32 %v347, 16
      %v415 = vrot.slane %v413, 7
      %v416 = vshll.u32 %v347, 16
      %v418 = vor.u32 %v415, %v416
      %v419 = vrot.slane %v415, 4
      %v421 = vshrl.u32 %v348, 16
      %v423 = vrot.slane %v421, 7
      %v424 = vshll.u32 %v348, 16
      %v426 = vor.u32 %v423, %v424
      %v427 = vrot.slane %v423, 4
      %v429 = vshrl.u32 %v349, 16
      %v431 = vrot.slane %v429, 7
      %v432 = vshll.u32 %v349, 16
      %v434 = vor.u32 %v431, %v432
      %v435 = vrot.slane %v431, 4
      %v437 = vshrl.u32 %v350, 16
      %v439 = vrot.slane %v437, 7
      %v440 = vshll.u32 %v350, 16
      %v442 = vor.u32 %v439, %v440
      %v443 = vrot.slane %v439, 4
      %v445 = vshrl.u32 %v351, 16
      %v447 = vrot.slane %v445, 7
      %v448 = vshll.u32 %v351, 16
      %v450 = vor.u32 %v447, %v448
      %v451 = vrot.slane %v447, 4
      %v453 = vshrl.u32 %v352, 16
      %v455 = vrot.slane %v453, 7
      %v456 = vshll.u32 %v352, 16
      %v458 = vor.u32 %v455, %v456
      %v459 = vrot.slane %v455, 4
      %v461 = vshrl.u32 %v353, 16
      %v463 = vrot.slane %v461, 7
      %v464 = vshll.u32 %v353, 16
      %v466 = vor.u32 %v463, %v464
      %v467 = vrot.slane %v463, 4
      %v469 = vshrl.u32 %v354, 16
      %v471 = vrot.slane %v469, 7
      %v472 = vshll.u32 %v354, 16
      %v474 = vor.u32 %v471, %v472
      %v475 = vrot.slane %v471, 4
      %v477 = vshrl.u32 %v355, 16
      %v479 = vrot.slane %v477, 7
      %v480 = vshll.u32 %v355, 16
      %v482 = vor.u32 %v479, %v480
      %v483 = vrot.slane %v479, 4
      %484 = vrot.lane.b32.xlu0 %v362, 32
      %v485 = vpop.permute.xlu0 %484
      %486 = vrot.lane.b32.xlu0 %v363, 32
      %v487 = vpop.permute.xlu0 %486
      %488 = vrot.lane.b32.xlu0 %v370, 32
      %v489 = vpop.permute.xlu0 %488
      %490 = vrot.lane.b32.xlu0 %v371, 32
      %v491 = vpop.permute.xlu0 %490
      %492 = vrot.lane.b32.xlu0 %v378, 32
      %v493 = vpop.permute.xlu0 %492
      %494 = vrot.lane.b32.xlu0 %v379, 32
      %v495 = vpop.permute.xlu0 %494
      %496 = vrot.lane.b32.xlu0 %v386, 32
      %v497 = vpop.permute.xlu0 %496
      %498 = vrot.lane.b32.xlu0 %v387, 32
      %v499 = vpop.permute.xlu0 %498
      %500 = vrot.lane.b32.xlu0 %v394, 32
      %v501 = vpop.permute.xlu0 %500
      %502 = vrot.lane.b32.xlu0 %v395, 32
      %v503 = vpop.permute.xlu0 %502
      %504 = vrot.lane.b32.xlu0 %v402, 32
      %v505 = vpop.permute.xlu0 %504
      %506 = vrot.lane.b32.xlu0 %v403, 32
      %v507 = vpop.permute.xlu0 %506
      %508 = vrot.lane.b32.xlu0 %v410, 32
      %v509 = vpop.permute.xlu0 %508
      %510 = vrot.lane.b32.xlu0 %v411, 32
      %v511 = vpop.permute.xlu0 %510
      %512 = vrot.lane.b32.xlu0 %v418, 32
      %v513 = vpop.permute.xlu0 %512
      %514 = vrot.lane.b32.xlu0 %v419, 32
      %v515 = vpop.permute.xlu0 %514
      %516 = vrot.lane.b32.xlu0 %v426, 32
      %v517 = vpop.permute.xlu0 %516
      %518 = vrot.lane.b32.xlu0 %v427, 32
      %v519 = vpop.permute.xlu0 %518
      %520 = vrot.lane.b32.xlu0 %v434, 32
      %v521 = vpop.permute.xlu0 %520
      %522 = vrot.lane.b32.xlu0 %v435, 32
      %v523 = vpop.permute.xlu0 %522
      %524 = vrot.lane.b32.xlu0 %v442, 32
      %v525 = vpop.permute.xlu0 %524
      %526 = vrot.lane.b32.xlu0 %v443, 32
      %v527 = vpop.permute.xlu0 %526
      %528 = vrot.lane.b32.xlu0 %v450, 32
      %v529 = vpop.permute.xlu0 %528
      %530 = vrot.lane.b32.xlu0 %v451, 32
      %v531 = vpop.permute.xlu0 %530
      %532 = vrot.lane.b32.xlu0 %v458, 32
      %v533 = vpop.permute.xlu0 %532
      %534 = vrot.lane.b32.xlu0 %v459, 32
      %v535 = vpop.permute.xlu0 %534
      %536 = vrot.lane.b32.xlu0 %v466, 32
      %v537 = vpop.permute.xlu0 %536
      %538 = vrot.lane.b32.xlu0 %v467, 32
      %v539 = vpop.permute.xlu0 %538
      %540 = vrot.lane.b32.xlu0 %v474, 32
      %v541 = vpop.permute.xlu0 %540
      %542 = vrot.lane.b32.xlu0 %v475, 32
      %v543 = vpop.permute.xlu0 %542
      %544 = vrot.lane.b32.xlu0 %v482, 32
      %v545 = vpop.permute.xlu0 %544
      %546 = vrot.lane.b32.xlu0 %v483, 32
      %v547 = vpop.permute.xlu0 %546
      %s580 = scalar_lea.vmem [#allocation4], 8
      %vm581 = vcmask 519424
      %vm582 = vsmask.f32 7938
      %vm583 = vmand %vm581, %vm582
      %v584 = vld [vmem:[%s580] sm:$0xf]
      %v585 = vsel %vm583, %v485, %v584
      %586 = vst [vmem:[%s580] sm:$0xf] %v585
      %vm587 = vcmask 516352
      %vm588 = vsmask.f32 256
      %vm589 = vmand %vm587, %vm588
      %v590 = vld [vmem:[%s580 + $0x4] sm:$0x1]
      %v591 = vsel %vm589, %v487, %v590
      %592 = vst [vmem:[%s580 + $0x4] sm:$0x1] %v591
      %v593 = vld [vmem:[%s580 + $0x8] sm:$0xf]
      %v594 = vsel %vm583, %v489, %v593
      %595 = vst [vmem:[%s580 + $0x8] sm:$0xf] %v594
      %v596 = vld [vmem:[%s580 + $0xc] sm:$0x1]
      %v597 = vsel %vm589, %v491, %v596
      %598 = vst [vmem:[%s580 + $0xc] sm:$0x1] %v597
      %v599 = vld [vmem:[%s580 + $0x10] sm:$0xf]
      %v600 = vsel %vm583, %v493, %v599
      %601 = vst [vmem:[%s580 + $0x10] sm:$0xf] %v600
      %v602 = vld [vmem:[%s580 + $0x14] sm:$0x1]
      %v603 = vsel %vm589, %v495, %v602
      %604 = vst [vmem:[%s580 + $0x14] sm:$0x1] %v603
      %v605 = vld [vmem:[%s580 + $0x18] sm:$0xf]
      %v606 = vsel %vm583, %v497, %v605
      %607 = vst [vmem:[%s580 + $0x18] sm:$0xf] %v606
      %v608 = vld [vmem:[%s580 + $0x1c] sm:$0x1]
      %v609 = vsel %vm589, %v499, %v608
      %610 = vst [vmem:[%s580 + $0x1c] sm:$0x1] %v609
      %v611 = vld [vmem:[%s580 + $0x20] sm:$0xf]
      %v612 = vsel %vm583, %v501, %v611
      %613 = vst [vmem:[%s580 + $0x20] sm:$0xf] %v612
      %v614 = vld [vmem:[%s580 + $0x24] sm:$0x1]
      %v615 = vsel %vm589, %v503, %v614
      %616 = vst [vmem:[%s580 + $0x24] sm:$0x1] %v615
      %v617 = vld [vmem:[%s580 + $0x28] sm:$0xf]
      %v618 = vsel %vm583, %v505, %v617
      %619 = vst [vmem:[%s580 + $0x28] sm:$0xf] %v618
      %v620 = vld [vmem:[%s580 + $0x2c] sm:$0x1]
      %v621 = vsel %vm589, %v507, %v620
      %622 = vst [vmem:[%s580 + $0x2c] sm:$0x1] %v621
      %v623 = vld [vmem:[%s580 + $0x30] sm:$0xf]
      %v624 = vsel %vm583, %v509, %v623
      %625 = vst [vmem:[%s580 + $0x30] sm:$0xf] %v624
      %v626 = vld [vmem:[%s580 + $0x34] sm:$0x1]
      %v627 = vsel %vm589, %v511, %v626
      %628 = vst [vmem:[%s580 + $0x34] sm:$0x1] %v627
      %v629 = vld [vmem:[%s580 + $0x38] sm:$0xf]
      %v630 = vsel %vm583, %v513, %v629
      %631 = vst [vmem:[%s580 + $0x38] sm:$0xf] %v630
      %v632 = vld [vmem:[%s580 + $0x3c] sm:$0x1]
      %v633 = vsel %vm589, %v515, %v632
      %634 = vst [vmem:[%s580 + $0x3c] sm:$0x1] %v633
      %v635 = vld [vmem:[%s580 + $0x50] sm:$0xf]
      %v636 = vsel %vm583, %v517, %v635
      %637 = vst [vmem:[%s580 + $0x50] sm:$0xf] %v636
      %v638 = vld [vmem:[%s580 + $0x54] sm:$0x1]
      %v639 = vsel %vm589, %v519, %v638
      %640 = vst [vmem:[%s580 + $0x54] sm:$0x1] %v639
      %v641 = vld [vmem:[%s580 + $0x58] sm:$0xf]
      %v642 = vsel %vm583, %v521, %v641
      %643 = vst [vmem:[%s580 + $0x58] sm:$0xf] %v642
      %v644 = vld [vmem:[%s580 + $0x5c] sm:$0x1]
      %v645 = vsel %vm589, %v523, %v644
      %646 = vst [vmem:[%s580 + $0x5c] sm:$0x1] %v645
      %v647 = vld [vmem:[%s580 + $0x60] sm:$0xf]
      %v648 = vsel %vm583, %v525, %v647
      %649 = vst [vmem:[%s580 + $0x60] sm:$0xf] %v648
      %v650 = vld [vmem:[%s580 + $0x64] sm:$0x1]
      %v651 = vsel %vm589, %v527, %v650
      %652 = vst [vmem:[%s580 + $0x64] sm:$0x1] %v651
      %v653 = vld [vmem:[%s580 + $0x68] sm:$0xf]
      %v654 = vsel %vm583, %v529, %v653
      %655 = vst [vmem:[%s580 + $0x68] sm:$0xf] %v654
      %v656 = vld [vmem:[%s580 + $0x6c] sm:$0x1]
      %v657 = vsel %vm589, %v531, %v656
      %658 = vst [vmem:[%s580 + $0x6c] sm:$0x1] %v657
      %v659 = vld [vmem:[%s580 + $0x70] sm:$0xf]
      %v660 = vsel %vm583, %v533, %v659
      %661 = vst [vmem:[%s580 + $0x70] sm:$0xf] %v660
      %v662 = vld [vmem:[%s580 + $0x74] sm:$0x1]
      %v663 = vsel %vm589, %v535, %v662
      %664 = vst [vmem:[%s580 + $0x74] sm:$0x1] %v663
      %v665 = vld [vmem:[%s580 + $0x78] sm:$0xf]
      %v666 = vsel %vm583, %v537, %v665
      %667 = vst [vmem:[%s580 + $0x78] sm:$0xf] %v666
      %v668 = vld [vmem:[%s580 + $0x7c] sm:$0x1]
      %v669 = vsel %vm589, %v539, %v668
      %670 = vst [vmem:[%s580 + $0x7c] sm:$0x1] %v669
      %v671 = vld [vmem:[%s580 + $0x80] sm:$0xf]
      %v672 = vsel %vm583, %v541, %v671
      %673 = vst [vmem:[%s580 + $0x80] sm:$0xf] %v672
      %v674 = vld [vmem:[%s580 + $0x84] sm:$0x1]
      %v675 = vsel %vm589, %v543, %v674
      %676 = vst [vmem:[%s580 + $0x84] sm:$0x1] %v675
      %v677 = vld [vmem:[%s580 + $0x88] sm:$0xf]
      %v678 = vsel %vm583, %v545, %v677
      %679 = vst [vmem:[%s580 + $0x88] sm:$0xf] %v678
      %v680 = vld [vmem:[%s580 + $0x8c] sm:$0x1]
      %v681 = vsel %vm589, %v547, %v680
      %682 = vst [vmem:[%s580 + $0x8c] sm:$0x1] %v681
      %p683 = scmp.lt.s32.totalorder %s19, 4
      // Predicated region
      $region37: #{convlstm_forward.1} parent=31 // pred_check
        %p684 = pneg %p683
      $region38: #{convlstm_forward.1} parent=31 // pred_check_branch
        %686 = sbr.rel (%p684) target = $region40
      $region39: #{convlstm_forward.1} parent=31 // pred_region
        %v687 = vld [vmem:[%s223] sm:$0xf]
        %v688 = vld [vmem:[%s223 + $0x4] sm:$0xf]
        %v689 = vld [vmem:[%s223 + $0x8] sm:$0xf]
        %v690 = vld [vmem:[%s223 + $0xc] sm:$0xf]
        %v691 = vld [vmem:[%s223 + $0x10] sm:$0xf]
        %v692 = vld [vmem:[%s223 + $0x14] sm:$0xf]
        %v693 = vld [vmem:[%s223 + $0x18] sm:$0xf]
        %v694 = vld [vmem:[%s223 + $0x1c] sm:$0xf]
        %v695 = vld [vmem:[%s223 + $0x20] sm:$0xf]
        %v696 = vld [vmem:[%s223 + $0x24] sm:$0xf]
        %v697 = vld [vmem:[%s223 + $0x28] sm:$0xf]
        %v698 = vld [vmem:[%s223 + $0x2c] sm:$0xf]
        %v699 = vld [vmem:[%s223 + $0x30] sm:$0xf]
        %v700 = vld [vmem:[%s223 + $0x34] sm:$0xf]
        %v701 = vld [vmem:[%s223 + $0x38] sm:$0xf]
        %v702 = vld [vmem:[%s223 + $0x3c] sm:$0xf]
        %v704 = vshrl.u32 %v687, 16
        %v706 = vrot.slane %v704, 7
        %v707 = vshll.u32 %v687, 16
        %v709 = vor.u32 %v706, %v707
        %v710 = vrot.slane %v706, 4
        %v712 = vshrl.u32 %v688, 16
        %v714 = vrot.slane %v712, 7
        %v715 = vshll.u32 %v688, 16
        %v717 = vor.u32 %v714, %v715
        %v718 = vrot.slane %v714, 4
        %v720 = vshrl.u32 %v689, 16
        %v722 = vrot.slane %v720, 7
        %v723 = vshll.u32 %v689, 16
        %v725 = vor.u32 %v722, %v723
        %v726 = vrot.slane %v722, 4
        %v728 = vshrl.u32 %v690, 16
        %v730 = vrot.slane %v728, 7
        %v731 = vshll.u32 %v690, 16
        %v733 = vor.u32 %v730, %v731
        %v734 = vrot.slane %v730, 4
        %v736 = vshrl.u32 %v691, 16
        %v738 = vrot.slane %v736, 7
        %v739 = vshll.u32 %v691, 16
        %v741 = vor.u32 %v738, %v739
        %v742 = vrot.slane %v738, 4
        %v744 = vshrl.u32 %v692, 16
        %v746 = vrot.slane %v744, 7
        %v747 = vshll.u32 %v692, 16
        %v749 = vor.u32 %v746, %v747
        %v750 = vrot.slane %v746, 4
        %v752 = vshrl.u32 %v693, 16
        %v754 = vrot.slane %v752, 7
        %v755 = vshll.u32 %v693, 16
        %v757 = vor.u32 %v754, %v755
        %v758 = vrot.slane %v754, 4
        %v760 = vshrl.u32 %v694, 16
        %v762 = vrot.slane %v760, 7
        %v763 = vshll.u32 %v694, 16
        %v765 = vor.u32 %v762, %v763
        %v766 = vrot.slane %v762, 4
        %v768 = vshrl.u32 %v695, 16
        %v770 = vrot.slane %v768, 7
        %v771 = vshll.u32 %v695, 16
        %v773 = vor.u32 %v770, %v771
        %v774 = vrot.slane %v770, 4
        %v776 = vshrl.u32 %v696, 16
        %v778 = vrot.slane %v776, 7
        %v779 = vshll.u32 %v696, 16
        %v781 = vor.u32 %v778, %v779
        %v782 = vrot.slane %v778, 4
        %v784 = vshrl.u32 %v697, 16
        %v786 = vrot.slane %v784, 7
        %v787 = vshll.u32 %v697, 16
        %v789 = vor.u32 %v786, %v787
        %v790 = vrot.slane %v786, 4
        %v792 = vshrl.u32 %v698, 16
        %v794 = vrot.slane %v792, 7
        %v795 = vshll.u32 %v698, 16
        %v797 = vor.u32 %v794, %v795
        %v798 = vrot.slane %v794, 4
        %v800 = vshrl.u32 %v699, 16
        %v802 = vrot.slane %v800, 7
        %v803 = vshll.u32 %v699, 16
        %v805 = vor.u32 %v802, %v803
        %v806 = vrot.slane %v802, 4
        %v808 = vshrl.u32 %v700, 16
        %v810 = vrot.slane %v808, 7
        %v811 = vshll.u32 %v700, 16
        %v813 = vor.u32 %v810, %v811
        %v814 = vrot.slane %v810, 4
        %v816 = vshrl.u32 %v701, 16
        %v818 = vrot.slane %v816, 7
        %v819 = vshll.u32 %v701, 16
        %v821 = vor.u32 %v818, %v819
        %v822 = vrot.slane %v818, 4
        %v824 = vshrl.u32 %v702, 16
        %v826 = vrot.slane %v824, 7
        %v827 = vshll.u32 %v702, 16
        %v829 = vor.u32 %v826, %v827
        %v830 = vrot.slane %v826, 4
        %vm863 = vcmask 257024
        %vm864 = vmand %vm863, %vm582
        %v865 = vld [vmem:[%s580] sm:$0xf]
        %v866 = vsel %vm864, %v709, %v865
        %867 = vst [vmem:[%s580] sm:$0xf] %v866
        %vm868 = vcmask 253952
        %vm869 = vmand %vm868, %vm588
        %v870 = vld [vmem:[%s580 + $0x4] sm:$0x1]
        %v871 = vsel %vm869, %v710, %v870
        %872 = vst [vmem:[%s580 + $0x4] sm:$0x1] %v871
        %v873 = vld [vmem:[%s580 + $0x8] sm:$0xf]
        %v874 = vsel %vm864, %v717, %v873
        %875 = vst [vmem:[%s580 + $0x8] sm:$0xf] %v874
        %v876 = vld [vmem:[%s580 + $0xc] sm:$0x1]
        %v877 = vsel %vm869, %v718, %v876
        %878 = vst [vmem:[%s580 + $0xc] sm:$0x1] %v877
        %v879 = vld [vmem:[%s580 + $0x10] sm:$0xf]
        %v880 = vsel %vm864, %v725, %v879
        %881 = vst [vmem:[%s580 + $0x10] sm:$0xf] %v880
        %v882 = vld [vmem:[%s580 + $0x14] sm:$0x1]
        %v883 = vsel %vm869, %v726, %v882
        %884 = vst [vmem:[%s580 + $0x14] sm:$0x1] %v883
        %v885 = vld [vmem:[%s580 + $0x18] sm:$0xf]
        %v886 = vsel %vm864, %v733, %v885
        %887 = vst [vmem:[%s580 + $0x18] sm:$0xf] %v886
        %v888 = vld [vmem:[%s580 + $0x1c] sm:$0x1]
        %v889 = vsel %vm869, %v734, %v888
        %890 = vst [vmem:[%s580 + $0x1c] sm:$0x1] %v889
        %v891 = vld [vmem:[%s580 + $0x20] sm:$0xf]
        %v892 = vsel %vm864, %v741, %v891
        %893 = vst [vmem:[%s580 + $0x20] sm:$0xf] %v892
        %v894 = vld [vmem:[%s580 + $0x24] sm:$0x1]
        %v895 = vsel %vm869, %v742, %v894
        %896 = vst [vmem:[%s580 + $0x24] sm:$0x1] %v895
        %v897 = vld [vmem:[%s580 + $0x28] sm:$0xf]
        %v898 = vsel %vm864, %v749, %v897
        %899 = vst [vmem:[%s580 + $0x28] sm:$0xf] %v898
        %v900 = vld [vmem:[%s580 + $0x2c] sm:$0x1]
        %v901 = vsel %vm869, %v750, %v900
        %902 = vst [vmem:[%s580 + $0x2c] sm:$0x1] %v901
        %v903 = vld [vmem:[%s580 + $0x30] sm:$0xf]
        %v904 = vsel %vm864, %v757, %v903
        %905 = vst [vmem:[%s580 + $0x30] sm:$0xf] %v904
        %v906 = vld [vmem:[%s580 + $0x34] sm:$0x1]
        %v907 = vsel %vm869, %v758, %v906
        %908 = vst [vmem:[%s580 + $0x34] sm:$0x1] %v907
        %v909 = vld [vmem:[%s580 + $0x38] sm:$0xf]
        %v910 = vsel %vm864, %v765, %v909
        %911 = vst [vmem:[%s580 + $0x38] sm:$0xf] %v910
        %v912 = vld [vmem:[%s580 + $0x3c] sm:$0x1]
        %v913 = vsel %vm869, %v766, %v912
        %914 = vst [vmem:[%s580 + $0x3c] sm:$0x1] %v913
        %v915 = vld [vmem:[%s580 + $0x50] sm:$0xf]
        %v916 = vsel %vm864, %v773, %v915
        %917 = vst [vmem:[%s580 + $0x50] sm:$0xf] %v916
        %v918 = vld [vmem:[%s580 + $0x54] sm:$0x1]
        %v919 = vsel %vm869, %v774, %v918
        %920 = vst [vmem:[%s580 + $0x54] sm:$0x1] %v919
        %v921 = vld [vmem:[%s580 + $0x58] sm:$0xf]
        %v922 = vsel %vm864, %v781, %v921
        %923 = vst [vmem:[%s580 + $0x58] sm:$0xf] %v922
        %v924 = vld [vmem:[%s580 + $0x5c] sm:$0x1]
        %v925 = vsel %vm869, %v782, %v924
        %926 = vst [vmem:[%s580 + $0x5c] sm:$0x1] %v925
        %v927 = vld [vmem:[%s580 + $0x60] sm:$0xf]
        %v928 = vsel %vm864, %v789, %v927
        %929 = vst [vmem:[%s580 + $0x60] sm:$0xf] %v928
        %v930 = vld [vmem:[%s580 + $0x64] sm:$0x1]
        %v931 = vsel %vm869, %v790, %v930
        %932 = vst [vmem:[%s580 + $0x64] sm:$0x1] %v931
        %v933 = vld [vmem:[%s580 + $0x68] sm:$0xf]
        %v934 = vsel %vm864, %v797, %v933
        %935 = vst [vmem:[%s580 + $0x68] sm:$0xf] %v934
        %v936 = vld [vmem:[%s580 + $0x6c] sm:$0x1]
        %v937 = vsel %vm869, %v798, %v936
        %938 = vst [vmem:[%s580 + $0x6c] sm:$0x1] %v937
        %v939 = vld [vmem:[%s580 + $0x70] sm:$0xf]
        %v940 = vsel %vm864, %v805, %v939
        %941 = vst [vmem:[%s580 + $0x70] sm:$0xf] %v940
        %v942 = vld [vmem:[%s580 + $0x74] sm:$0x1]
        %v943 = vsel %vm869, %v806, %v942
        %944 = vst [vmem:[%s580 + $0x74] sm:$0x1] %v943
        %v945 = vld [vmem:[%s580 + $0x78] sm:$0xf]
        %v946 = vsel %vm864, %v813, %v945
        %947 = vst [vmem:[%s580 + $0x78] sm:$0xf] %v946
        %v948 = vld [vmem:[%s580 + $0x7c] sm:$0x1]
        %v949 = vsel %vm869, %v814, %v948
        %950 = vst [vmem:[%s580 + $0x7c] sm:$0x1] %v949
        %v951 = vld [vmem:[%s580 + $0x80] sm:$0xf]
        %v952 = vsel %vm864, %v821, %v951
        %953 = vst [vmem:[%s580 + $0x80] sm:$0xf] %v952
        %v954 = vld [vmem:[%s580 + $0x84] sm:$0x1]
        %v955 = vsel %vm869, %v822, %v954
        %956 = vst [vmem:[%s580 + $0x84] sm:$0x1] %v955
        %v957 = vld [vmem:[%s580 + $0x88] sm:$0xf]
        %v958 = vsel %vm864, %v829, %v957
        %959 = vst [vmem:[%s580 + $0x88] sm:$0xf] %v958
        %v960 = vld [vmem:[%s580 + $0x8c] sm:$0x1]
        %v961 = vsel %vm869, %v830, %v960
        %962 = vst [vmem:[%s580 + $0x8c] sm:$0x1] %v961
      $region40: #{convlstm_forward.1} parent=31 // pred_fallthru
        _
      %p963 = scmp.ge.s32.totalorder %s19, 4
      // Predicated region
      $region41: #{convlstm_forward.1} parent=31 // pred_check
        %p964 = pneg %p963
      $region42: #{convlstm_forward.1} parent=31 // pred_check_branch
        %966 = sbr.rel (%p964) target = $region44
      $region43: #{convlstm_forward.1} parent=31 // pred_region
        %vm999 = vcmask 257024
        %vm1000 = vmand %vm999, %vm582
        %v1001 = vld [vmem:[%s580] sm:$0xf]
        %v1002 = vsel %vm1000, %v362, %v1001
        %1003 = vst [vmem:[%s580] sm:$0xf] %v1002
        %vm1004 = vcmask 253952
        %vm1005 = vmand %vm1004, %vm588
        %v1006 = vld [vmem:[%s580 + $0x4] sm:$0x1]
        %v1007 = vsel %vm1005, %v363, %v1006
        %1008 = vst [vmem:[%s580 + $0x4] sm:$0x1] %v1007
        %v1009 = vld [vmem:[%s580 + $0x8] sm:$0xf]
        %v1010 = vsel %vm1000, %v370, %v1009
        %1011 = vst [vmem:[%s580 + $0x8] sm:$0xf] %v1010
        %v1012 = vld [vmem:[%s580 + $0xc] sm:$0x1]
        %v1013 = vsel %vm1005, %v371, %v1012
        %1014 = vst [vmem:[%s580 + $0xc] sm:$0x1] %v1013
        %v1015 = vld [vmem:[%s580 + $0x10] sm:$0xf]
        %v1016 = vsel %vm1000, %v378, %v1015
        %1017 = vst [vmem:[%s580 + $0x10] sm:$0xf] %v1016
        %v1018 = vld [vmem:[%s580 + $0x14] sm:$0x1]
        %v1019 = vsel %vm1005, %v379, %v1018
        %1020 = vst [vmem:[%s580 + $0x14] sm:$0x1] %v1019
        %v1021 = vld [vmem:[%s580 + $0x18] sm:$0xf]
        %v1022 = vsel %vm1000, %v386, %v1021
        %1023 = vst [vmem:[%s580 + $0x18] sm:$0xf] %v1022
        %v1024 = vld [vmem:[%s580 + $0x1c] sm:$0x1]
        %v1025 = vsel %vm1005, %v387, %v1024
        %1026 = vst [vmem:[%s580 + $0x1c] sm:$0x1] %v1025
        %v1027 = vld [vmem:[%s580 + $0x20] sm:$0xf]
        %v1028 = vsel %vm1000, %v394, %v1027
        %1029 = vst [vmem:[%s580 + $0x20] sm:$0xf] %v1028
        %v1030 = vld [vmem:[%s580 + $0x24] sm:$0x1]
        %v1031 = vsel %vm1005, %v395, %v1030
        %1032 = vst [vmem:[%s580 + $0x24] sm:$0x1] %v1031
        %v1033 = vld [vmem:[%s580 + $0x28] sm:$0xf]
        %v1034 = vsel %vm1000, %v402, %v1033
        %1035 = vst [vmem:[%s580 + $0x28] sm:$0xf] %v1034
        %v1036 = vld [vmem:[%s580 + $0x2c] sm:$0x1]
        %v1037 = vsel %vm1005, %v403, %v1036
        %1038 = vst [vmem:[%s580 + $0x2c] sm:$0x1] %v1037
        %v1039 = vld [vmem:[%s580 + $0x30] sm:$0xf]
        %v1040 = vsel %vm1000, %v410, %v1039
        %1041 = vst [vmem:[%s580 + $0x30] sm:$0xf] %v1040
        %v1042 = vld [vmem:[%s580 + $0x34] sm:$0x1]
        %v1043 = vsel %vm1005, %v411, %v1042
        %1044 = vst [vmem:[%s580 + $0x34] sm:$0x1] %v1043
        %v1045 = vld [vmem:[%s580 + $0x38] sm:$0xf]
        %v1046 = vsel %vm1000, %v418, %v1045
        %1047 = vst [vmem:[%s580 + $0x38] sm:$0xf] %v1046
        %v1048 = vld [vmem:[%s580 + $0x3c] sm:$0x1]
        %v1049 = vsel %vm1005, %v419, %v1048
        %1050 = vst [vmem:[%s580 + $0x3c] sm:$0x1] %v1049
        %v1051 = vld [vmem:[%s580 + $0x50] sm:$0xf]
        %v1052 = vsel %vm1000, %v426, %v1051
        %1053 = vst [vmem:[%s580 + $0x50] sm:$0xf] %v1052
        %v1054 = vld [vmem:[%s580 + $0x54] sm:$0x1]
        %v1055 = vsel %vm1005, %v427, %v1054
        %1056 = vst [vmem:[%s580 + $0x54] sm:$0x1] %v1055
        %v1057 = vld [vmem:[%s580 + $0x58] sm:$0xf]
        %v1058 = vsel %vm1000, %v434, %v1057
        %1059 = vst [vmem:[%s580 + $0x58] sm:$0xf] %v1058
        %v1060 = vld [vmem:[%s580 + $0x5c] sm:$0x1]
        %v1061 = vsel %vm1005, %v435, %v1060
        %1062 = vst [vmem:[%s580 + $0x5c] sm:$0x1] %v1061
        %v1063 = vld [vmem:[%s580 + $0x60] sm:$0xf]
        %v1064 = vsel %vm1000, %v442, %v1063
        %1065 = vst [vmem:[%s580 + $0x60] sm:$0xf] %v1064
        %v1066 = vld [vmem:[%s580 + $0x64] sm:$0x1]
        %v1067 = vsel %vm1005, %v443, %v1066
        %1068 = vst [vmem:[%s580 + $0x64] sm:$0x1] %v1067
        %v1069 = vld [vmem:[%s580 + $0x68] sm:$0xf]
        %v1070 = vsel %vm1000, %v450, %v1069
        %1071 = vst [vmem:[%s580 + $0x68] sm:$0xf] %v1070
        %v1072 = vld [vmem:[%s580 + $0x6c] sm:$0x1]
        %v1073 = vsel %vm1005, %v451, %v1072
        %1074 = vst [vmem:[%s580 + $0x6c] sm:$0x1] %v1073
        %v1075 = vld [vmem:[%s580 + $0x70] sm:$0xf]
        %v1076 = vsel %vm1000, %v458, %v1075
        %1077 = vst [vmem:[%s580 + $0x70] sm:$0xf] %v1076
        %v1078 = vld [vmem:[%s580 + $0x74] sm:$0x1]
        %v1079 = vsel %vm1005, %v459, %v1078
        %1080 = vst [vmem:[%s580 + $0x74] sm:$0x1] %v1079
        %v1081 = vld [vmem:[%s580 + $0x78] sm:$0xf]
        %v1082 = vsel %vm1000, %v466, %v1081
        %1083 = vst [vmem:[%s580 + $0x78] sm:$0xf] %v1082
        %v1084 = vld [vmem:[%s580 + $0x7c] sm:$0x1]
        %v1085 = vsel %vm1005, %v467, %v1084
        %1086 = vst [vmem:[%s580 + $0x7c] sm:$0x1] %v1085
        %v1087 = vld [vmem:[%s580 + $0x80] sm:$0xf]
        %v1088 = vsel %vm1000, %v474, %v1087
        %1089 = vst [vmem:[%s580 + $0x80] sm:$0xf] %v1088
        %v1090 = vld [vmem:[%s580 + $0x84] sm:$0x1]
        %v1091 = vsel %vm1005, %v475, %v1090
        %1092 = vst [vmem:[%s580 + $0x84] sm:$0x1] %v1091
        %v1093 = vld [vmem:[%s580 + $0x88] sm:$0xf]
        %v1094 = vsel %vm1000, %v482, %v1093
        %1095 = vst [vmem:[%s580 + $0x88] sm:$0xf] %v1094
        %v1096 = vld [vmem:[%s580 + $0x8c] sm:$0x1]
        %v1097 = vsel %vm1005, %v483, %v1096
        %1098 = vst [vmem:[%s580 + $0x8c] sm:$0x1] %v1097
      $region44: #{convlstm_forward.1} parent=31 // pred_fallthru
        _
      %v1099 = vld [vmem:[#allocation4] sm:$0xf]
      %v1100 = vld [vmem:[#allocation4 + $0x4] sm:$0x1]
      %v1101 = vld [vmem:[#allocation4 + $0x8] sm:$0xf]
      %v1102 = vld [vmem:[#allocation4 + $0xc] sm:$0x1]
      %v1103 = vld [vmem:[#allocation4 + $0x10] sm:$0xf]
      %v1104 = vld [vmem:[#allocation4 + $0x14] sm:$0x1]
      %v1105 = vld [vmem:[#allocation4 + $0x18] sm:$0xf]
      %v1106 = vld [vmem:[#allocation4 + $0x1c] sm:$0x1]
      %v1107 = vld [vmem:[#allocation4 + $0x20] sm:$0xf]
      %v1108 = vld [vmem:[#allocation4 + $0x24] sm:$0x1]
      %v1109 = vld [vmem:[#allocation4 + $0x28] sm:$0xf]
      %v1110 = vld [vmem:[#allocation4 + $0x2c] sm:$0x1]
      %v1111 = vld [vmem:[#allocation4 + $0x30] sm:$0xf]
      %v1112 = vld [vmem:[#allocation4 + $0x34] sm:$0x1]
      %v1113 = vld [vmem:[#allocation4 + $0x38] sm:$0xf]
      %v1114 = vld [vmem:[#allocation4 + $0x3c] sm:$0x1]
      %v1115 = vld [vmem:[#allocation4 + $0x40] sm:$0xf]
      %v1116 = vld [vmem:[#allocation4 + $0x44] sm:$0x1]
      %v1117 = vld [vmem:[#allocation4 + $0x48] sm:$0xf]
      %v1118 = vld [vmem:[#allocation4 + $0x4c] sm:$0x1]
      %v1119 = vld [vmem:[#allocation4 + $0x50] sm:$0xf]
      %v1120 = vld [vmem:[#allocation4 + $0x54] sm:$0x1]
      %v1121 = vld [vmem:[#allocation4 + $0x58] sm:$0xf]
      %v1122 = vld [vmem:[#allocation4 + $0x5c] sm:$0x1]
      %v1123 = vld [vmem:[#allocation4 + $0x60] sm:$0xf]
      %v1124 = vld [vmem:[#allocation4 + $0x64] sm:$0x1]
      %v1125 = vld [vmem:[#allocation4 + $0x68] sm:$0xf]
      %v1126 = vld [vmem:[#allocation4 + $0x6c] sm:$0x1]
      %v1127 = vld [vmem:[#allocation4 + $0x70] sm:$0xf]
      %v1128 = vld [vmem:[#allocation4 + $0x74] sm:$0x1]
      %v1129 = vld [vmem:[#allocation4 + $0x78] sm:$0xf]
      %v1130 = vld [vmem:[#allocation4 + $0x7c] sm:$0x1]
      %v1131 = vld [vmem:[#allocation4 + $0x80] sm:$0xf]
      %v1132 = vld [vmem:[#allocation4 + $0x84] sm:$0x1]
      %v1133 = vld [vmem:[#allocation4 + $0x88] sm:$0xf]
      %v1134 = vld [vmem:[#allocation4 + $0x8c] sm:$0x1]
      %v1135 = vld [vmem:[#allocation4 + $0x90] sm:$0xf]
      %v1136 = vld [vmem:[#allocation4 + $0x94] sm:$0x1]
      %v1137 = vld [vmem:[#allocation4 + $0x98] sm:$0xf]
      %v1138 = vld [vmem:[#allocation4 + $0x9c] sm:$0x1]
      %vm1139 = vsmask.f32 3328
      %vm1140 = vsmask.f32 7440
      %vm1141 = vmor %vm1139, %vm1140
      %v1143 = vshrl.u32 %v1099, 16
      %v1145 = vrot.slane %v1143, 4
      %v1146 = vshll.u32 %v1099, 16
      %v1148 = vrot.slane %v1146, 5
      %v1149 = vor.u32 %v1145, %v1148
      %v1150 = vrot.slane %v1149, 4
      %v1152 = vshll.u32 %v1100, 16
      %v1154 = vrot.slane %v1152, 5
      %v1155 = vsel %vm1141, %v1150, %v1154
      %v1157 = vshrl.u32 %v1101, 16
      %v1159 = vrot.slane %v1157, 4
      %v1160 = vshll.u32 %v1101, 16
      %v1162 = vrot.slane %v1160, 5
      %v1163 = vor.u32 %v1159, %v1162
      %v1164 = vrot.slane %v1163, 4
      %v1166 = vshll.u32 %v1102, 16
      %v1168 = vrot.slane %v1166, 5
      %v1169 = vsel %vm1141, %v1164, %v1168
      %v1171 = vshrl.u32 %v1103, 16
      %v1173 = vrot.slane %v1171, 4
      %v1174 = vshll.u32 %v1103, 16
      %v1176 = vrot.slane %v1174, 5
      %v1177 = vor.u32 %v1173, %v1176
      %v1178 = vrot.slane %v1177, 4
      %v1180 = vshll.u32 %v1104, 16
      %v1182 = vrot.slane %v1180, 5
      %v1183 = vsel %vm1141, %v1178, %v1182
      %v1185 = vshrl.u32 %v1105, 16
      %v1187 = vrot.slane %v1185, 4
      %v1188 = vshll.u32 %v1105, 16
      %v1190 = vrot.slane %v1188, 5
      %v1191 = vor.u32 %v1187, %v1190
      %v1192 = vrot.slane %v1191, 4
      %v1194 = vshll.u32 %v1106, 16
      %v1196 = vrot.slane %v1194, 5
      %v1197 = vsel %vm1141, %v1192, %v1196
      %v1199 = vshrl.u32 %v1107, 16
      %v1201 = vrot.slane %v1199, 4
      %v1202 = vshll.u32 %v1107, 16
      %v1204 = vrot.slane %v1202, 5
      %v1205 = vor.u32 %v1201, %v1204
      %v1206 = vrot.slane %v1205, 4
      %v1208 = vshll.u32 %v1108, 16
      %v1210 = vrot.slane %v1208, 5
      %v1211 = vsel %vm1141, %v1206, %v1210
      %v1213 = vshrl.u32 %v1109, 16
      %v1215 = vrot.slane %v1213, 4
      %v1216 = vshll.u32 %v1109, 16
      %v1218 = vrot.slane %v1216, 5
      %v1219 = vor.u32 %v1215, %v1218
      %v1220 = vrot.slane %v1219, 4
      %v1222 = vshll.u32 %v1110, 16
      %v1224 = vrot.slane %v1222, 5
      %v1225 = vsel %vm1141, %v1220, %v1224
      %v1227 = vshrl.u32 %v1111, 16
      %v1229 = vrot.slane %v1227, 4
      %v1230 = vshll.u32 %v1111, 16
      %v1232 = vrot.slane %v1230, 5
      %v1233 = vor.u32 %v1229, %v1232
      %v1234 = vrot.slane %v1233, 4
      %v1236 = vshll.u32 %v1112, 16
      %v1238 = vrot.slane %v1236, 5
      %v1239 = vsel %vm1141, %v1234, %v1238
      %v1241 = vshrl.u32 %v1113, 16
      %v1243 = vrot.slane %v1241, 4
      %v1244 = vshll.u32 %v1113, 16
      %v1246 = vrot.slane %v1244, 5
      %v1247 = vor.u32 %v1243, %v1246
      %v1248 = vrot.slane %v1247, 4
      %v1250 = vshll.u32 %v1114, 16
      %v1252 = vrot.slane %v1250, 5
      %v1253 = vsel %vm1141, %v1248, %v1252
      %v1255 = vshrl.u32 %v1119, 16
      %v1257 = vrot.slane %v1255, 4
      %v1258 = vshll.u32 %v1119, 16
      %v1260 = vrot.slane %v1258, 5
      %v1261 = vor.u32 %v1257, %v1260
      %v1262 = vrot.slane %v1261, 4
      %v1264 = vshll.u32 %v1120, 16
      %v1266 = vrot.slane %v1264, 5
      %v1267 = vsel %vm1141, %v1262, %v1266
      %v1269 = vshrl.u32 %v1121, 16
      %v1271 = vrot.slane %v1269, 4
      %v1272 = vshll.u32 %v1121, 16
      %v1274 = vrot.slane %v1272, 5
      %v1275 = vor.u32 %v1271, %v1274
      %v1276 = vrot.slane %v1275, 4
      %v1278 = vshll.u32 %v1122, 16
      %v1280 = vrot.slane %v1278, 5
      %v1281 = vsel %vm1141, %v1276, %v1280
      %v1283 = vshrl.u32 %v1123, 16
      %v1285 = vrot.slane %v1283, 4
      %v1286 = vshll.u32 %v1123, 16
      %v1288 = vrot.slane %v1286, 5
      %v1289 = vor.u32 %v1285, %v1288
      %v1290 = vrot.slane %v1289, 4
      %v1292 = vshll.u32 %v1124, 16
      %v1294 = vrot.slane %v1292, 5
      %v1295 = vsel %vm1141, %v1290, %v1294
      %v1297 = vshrl.u32 %v1125, 16
      %v1299 = vrot.slane %v1297, 4
      %v1300 = vshll.u32 %v1125, 16
      %v1302 = vrot.slane %v1300, 5
      %v1303 = vor.u32 %v1299, %v1302
      %v1304 = vrot.slane %v1303, 4
      %v1306 = vshll.u32 %v1126, 16
      %v1308 = vrot.slane %v1306, 5
      %v1309 = vsel %vm1141, %v1304, %v1308
      %v1311 = vshrl.u32 %v1127, 16
      %v1313 = vrot.slane %v1311, 4
      %v1314 = vshll.u32 %v1127, 16
      %v1316 = vrot.slane %v1314, 5
      %v1317 = vor.u32 %v1313, %v1316
      %v1318 = vrot.slane %v1317, 4
      %v1320 = vshll.u32 %v1128, 16
      %v1322 = vrot.slane %v1320, 5
      %v1323 = vsel %vm1141, %v1318, %v1322
      %v1325 = vshrl.u32 %v1129, 16
      %v1327 = vrot.slane %v1325, 4
      %v1328 = vshll.u32 %v1129, 16
      %v1330 = vrot.slane %v1328, 5
      %v1331 = vor.u32 %v1327, %v1330
      %v1332 = vrot.slane %v1331, 4
      %v1334 = vshll.u32 %v1130, 16
      %v1336 = vrot.slane %v1334, 5
      %v1337 = vsel %vm1141, %v1332, %v1336
      %v1339 = vshrl.u32 %v1131, 16
      %v1341 = vrot.slane %v1339, 4
      %v1342 = vshll.u32 %v1131, 16
      %v1344 = vrot.slane %v1342, 5
      %v1345 = vor.u32 %v1341, %v1344
      %v1346 = vrot.slane %v1345, 4
      %v1348 = vshll.u32 %v1132, 16
      %v1350 = vrot.slane %v1348, 5
      %v1351 = vsel %vm1141, %v1346, %v1350
      %v1353 = vshrl.u32 %v1133, 16
      %v1355 = vrot.slane %v1353, 4
      %v1356 = vshll.u32 %v1133, 16
      %v1358 = vrot.slane %v1356, 5
      %v1359 = vor.u32 %v1355, %v1358
      %v1360 = vrot.slane %v1359, 4
      %v1362 = vshll.u32 %v1134, 16
      %v1364 = vrot.slane %v1362, 5
      %v1365 = vsel %vm1141, %v1360, %v1364
      %vm1398 = vcmask 1042432
      %vm1399 = vcmask 1046532
      %vm1400 = vmor %vm1398, %vm1399
      %v1401 = vrot.slane %v1099, 5
      %v1402 = vrot.slane %v1401, 4
      %v1403 = vrot.slane %v1100, 5
      %v1404 = vsel %vm1400, %v1402, %v1403
      %v1405 = vrot.slane %v1101, 5
      %v1406 = vrot.slane %v1405, 4
      %v1407 = vrot.slane %v1102, 5
      %v1408 = vsel %vm1400, %v1406, %v1407
      %v1409 = vrot.slane %v1103, 5
      %v1410 = vrot.slane %v1409, 4
      %v1411 = vrot.slane %v1104, 5
      %v1412 = vsel %vm1400, %v1410, %v1411
      %v1413 = vrot.slane %v1105, 5
      %v1414 = vrot.slane %v1413, 4
      %v1415 = vrot.slane %v1106, 5
      %v1416 = vsel %vm1400, %v1414, %v1415
      %v1417 = vrot.slane %v1107, 5
      %v1418 = vrot.slane %v1417, 4
      %v1419 = vrot.slane %v1108, 5
      %v1420 = vsel %vm1400, %v1418, %v1419
      %v1421 = vrot.slane %v1109, 5
      %v1422 = vrot.slane %v1421, 4
      %v1423 = vrot.slane %v1110, 5
      %v1424 = vsel %vm1400, %v1422, %v1423
      %v1425 = vrot.slane %v1111, 5
      %v1426 = vrot.slane %v1425, 4
      %v1427 = vrot.slane %v1112, 5
      %v1428 = vsel %vm1400, %v1426, %v1427
      %v1429 = vrot.slane %v1113, 5
      %v1430 = vrot.slane %v1429, 4
      %v1431 = vrot.slane %v1114, 5
      %v1432 = vsel %vm1400, %v1430, %v1431
      %v1433 = vrot.slane %v1119, 5
      %v1434 = vrot.slane %v1433, 4
      %v1435 = vrot.slane %v1120, 5
      %v1436 = vsel %vm1400, %v1434, %v1435
      %v1437 = vrot.slane %v1121, 5
      %v1438 = vrot.slane %v1437, 4
      %v1439 = vrot.slane %v1122, 5
      %v1440 = vsel %vm1400, %v1438, %v1439
      %v1441 = vrot.slane %v1123, 5
      %v1442 = vrot.slane %v1441, 4
      %v1443 = vrot.slane %v1124, 5
      %v1444 = vsel %vm1400, %v1442, %v1443
      %v1445 = vrot.slane %v1125, 5
      %v1446 = vrot.slane %v1445, 4
      %v1447 = vrot.slane %v1126, 5
      %v1448 = vsel %vm1400, %v1446, %v1447
      %v1449 = vrot.slane %v1127, 5
      %v1450 = vrot.slane %v1449, 4
      %v1451 = vrot.slane %v1128, 5
      %v1452 = vsel %vm1400, %v1450, %v1451
      %v1453 = vrot.slane %v1129, 5
      %v1454 = vrot.slane %v1453, 4
      %v1455 = vrot.slane %v1130, 5
      %v1456 = vsel %vm1400, %v1454, %v1455
      %v1457 = vrot.slane %v1131, 5
      %v1458 = vrot.slane %v1457, 4
      %v1459 = vrot.slane %v1132, 5
      %v1460 = vsel %vm1400, %v1458, %v1459
      %v1461 = vrot.slane %v1133, 5
      %v1462 = vrot.slane %v1461, 4
      %v1463 = vrot.slane %v1134, 5
      %v1464 = vsel %vm1400, %v1462, %v1463
      %v1466 = vshrl.u32 %v1115, 16
      %v1468 = vrot.slane %v1466, 4
      %v1469 = vshll.u32 %v1115, 16
      %v1471 = vrot.slane %v1469, 5
      %v1472 = vor.u32 %v1468, %v1471
      %v1473 = vrot.slane %v1472, 4
      %v1475 = vshll.u32 %v1116, 16
      %v1477 = vrot.slane %v1475, 5
      %v1478 = vsel %vm1141, %v1473, %v1477
      %v1480 = vshrl.u32 %v1135, 16
      %v1482 = vrot.slane %v1480, 4
      %v1483 = vshll.u32 %v1135, 16
      %v1485 = vrot.slane %v1483, 5
      %v1486 = vor.u32 %v1482, %v1485
      %v1487 = vrot.slane %v1486, 4
      %v1489 = vshll.u32 %v1136, 16
      %v1491 = vrot.slane %v1489, 5
      %v1492 = vsel %vm1141, %v1487, %v1491
      %v1497 = vrot.slane %v1115, 5
      %v1498 = vrot.slane %v1497, 4
      %v1499 = vrot.slane %v1116, 5
      %v1500 = vsel %vm1400, %v1498, %v1499
      %v1501 = vrot.slane %v1135, 5
      %v1502 = vrot.slane %v1501, 4
      %v1503 = vrot.slane %v1136, 5
      %v1504 = vsel %vm1400, %v1502, %v1503
      %v1506 = vshrl.u32 %v1117, 16
      %v1508 = vrot.slane %v1506, 4
      %v1509 = vshll.u32 %v1117, 16
      %v1511 = vrot.slane %v1509, 5
      %v1512 = vor.u32 %v1508, %v1511
      %v1513 = vrot.slane %v1512, 4
      %v1515 = vshll.u32 %v1118, 16
      %v1517 = vrot.slane %v1515, 5
      %v1518 = vsel %vm1141, %v1513, %v1517
      %v1520 = vshrl.u32 %v1137, 16
      %v1522 = vrot.slane %v1520, 4
      %v1523 = vshll.u32 %v1137, 16
      %v1525 = vrot.slane %v1523, 5
      %v1526 = vor.u32 %v1522, %v1525
      %v1527 = vrot.slane %v1526, 4
      %v1529 = vshll.u32 %v1138, 16
      %v1531 = vrot.slane %v1529, 5
      %v1532 = vsel %vm1141, %v1527, %v1531
      %v1537 = vrot.slane %v1117, 5
      %v1538 = vrot.slane %v1537, 4
      %v1539 = vrot.slane %v1118, 5
      %v1540 = vsel %vm1400, %v1538, %v1539
      %v1541 = vrot.slane %v1137, 5
      %v1542 = vrot.slane %v1541, 4
      %v1543 = vrot.slane %v1138, 5
      %v1544 = vsel %vm1400, %v1542, %v1543
      %v1545 = vunpack.c.l.b16 %v1099
      %v1546 = vunpack.c.l.b16 %v1101
      %v1547 = vunpack.c.l.b16 %v1103
      %v1548 = vunpack.c.l.b16 %v1105
      %v1549 = vunpack.c.l.b16 %v1107
      %v1550 = vunpack.c.l.b16 %v1109
      %v1551 = vunpack.c.l.b16 %v1111
      %v1552 = vunpack.c.l.b16 %v1113
      %v1553 = vunpack.c.l.b16 %v1119
      %v1554 = vunpack.c.l.b16 %v1121
      %v1555 = vunpack.c.l.b16 %v1123
      %v1556 = vunpack.c.l.b16 %v1125
      %v1557 = vunpack.c.l.b16 %v1127
      %v1558 = vunpack.c.l.b16 %v1129
      %v1559 = vunpack.c.l.b16 %v1131
      %v1560 = vunpack.c.l.b16 %v1133
      %v1561 = vpack.c.b16 %v1546, %v1545
      %v1562 = vpack.c.b16 %v1548, %v1547
      %v1563 = vpack.c.b16 %v1550, %v1549
      %v1564 = vpack.c.b16 %v1552, %v1551
      %v1565 = vpack.c.b16 %v1554, %v1553
      %v1566 = vpack.c.b16 %v1556, %v1555
      %v1567 = vpack.c.b16 %v1558, %v1557
      %v1568 = vpack.c.b16 %v1560, %v1559
      %v1569 = vunpack.c.l.b16 %v1155
      %v1570 = vunpack.c.l.b16 %v1169
      %v1571 = vunpack.c.l.b16 %v1183
      %v1572 = vunpack.c.l.b16 %v1197
      %v1573 = vunpack.c.l.b16 %v1211
      %v1574 = vunpack.c.l.b16 %v1225
      %v1575 = vunpack.c.l.b16 %v1239
      %v1576 = vunpack.c.l.b16 %v1253
      %v1577 = vunpack.c.l.b16 %v1267
      %v1578 = vunpack.c.l.b16 %v1281
      %v1579 = vunpack.c.l.b16 %v1295
      %v1580 = vunpack.c.l.b16 %v1309
      %v1581 = vunpack.c.l.b16 %v1323
      %v1582 = vunpack.c.l.b16 %v1337
      %v1583 = vunpack.c.l.b16 %v1351
      %v1584 = vunpack.c.l.b16 %v1365
      %v1585 = vpack.c.b16 %v1570, %v1569
      %v1586 = vpack.c.b16 %v1572, %v1571
      %v1587 = vpack.c.b16 %v1574, %v1573
      %v1588 = vpack.c.b16 %v1576, %v1575
      %v1589 = vpack.c.b16 %v1578, %v1577
      %v1590 = vpack.c.b16 %v1580, %v1579
      %v1591 = vpack.c.b16 %v1582, %v1581
      %v1592 = vpack.c.b16 %v1584, %v1583
      %1593 = vrot.lane.b32.xlu0 %v1585, 64
      %v1594 = vpop.permute.xlu0 %1593
      %1595 = vrot.lane.b32.xlu0 %v1586, 64
      %v1596 = vpop.permute.xlu0 %1595
      %1597 = vrot.lane.b32.xlu0 %v1587, 64
      %v1598 = vpop.permute.xlu0 %1597
      %1599 = vrot.lane.b32.xlu0 %v1588, 64
      %v1600 = vpop.permute.xlu0 %1599
      %1601 = vrot.lane.b32.xlu0 %v1589, 64
      %v1602 = vpop.permute.xlu0 %1601
      %1603 = vrot.lane.b32.xlu0 %v1590, 64
      %v1604 = vpop.permute.xlu0 %1603
      %1605 = vrot.lane.b32.xlu0 %v1591, 64
      %v1606 = vpop.permute.xlu0 %1605
      %1607 = vrot.lane.b32.xlu0 %v1592, 64
      %v1608 = vpop.permute.xlu0 %1607
      %v1609 = vunpack.c.l.b16 %v1404
      %v1610 = vunpack.c.l.b16 %v1408
      %v1611 = vunpack.c.l.b16 %v1412
      %v1612 = vunpack.c.l.b16 %v1416
      %v1613 = vunpack.c.l.b16 %v1420
      %v1614 = vunpack.c.l.b16 %v1424
      %v1615 = vunpack.c.l.b16 %v1428
      %v1616 = vunpack.c.l.b16 %v1432
      %v1617 = vunpack.c.l.b16 %v1436
      %v1618 = vunpack.c.l.b16 %v1440
      %v1619 = vunpack.c.l.b16 %v1444
      %v1620 = vunpack.c.l.b16 %v1448
      %v1621 = vunpack.c.l.b16 %v1452
      %v1622 = vunpack.c.l.b16 %v1456
      %v1623 = vunpack.c.l.b16 %v1460
      %v1624 = vunpack.c.l.b16 %v1464
      %v1625 = vpack.c.b16 %v1610, %v1609
      %v1626 = vpack.c.b16 %v1612, %v1611
      %v1627 = vpack.c.b16 %v1614, %v1613
      %v1628 = vpack.c.b16 %v1616, %v1615
      %v1629 = vpack.c.b16 %v1618, %v1617
      %v1630 = vpack.c.b16 %v1620, %v1619
      %v1631 = vpack.c.b16 %v1622, %v1621
      %v1632 = vpack.c.b16 %v1624, %v1623
      %v1633 = vunpack.c.l.b16 %v1115
      %v1634 = vunpack.c.l.b16 %v1135
      %v1635 = vpack.c.b16 %v1547, %v1546
      %v1636 = vpack.c.b16 %v1549, %v1548
      %v1637 = vpack.c.b16 %v1551, %v1550
      %v1638 = vpack.c.b16 %v1633, %v1552
      %v1639 = vpack.c.b16 %v1555, %v1554
      %v1640 = vpack.c.b16 %v1557, %v1556
      %v1641 = vpack.c.b16 %v1559, %v1558
      %v1642 = vpack.c.b16 %v1634, %v1560
      %1643 = vrot.lane.b32.xlu0 %v1635, 64
      %v1644 = vpop.permute.xlu0 %1643
      %1645 = vrot.lane.b32.xlu0 %v1636, 64
      %v1646 = vpop.permute.xlu0 %1645
      %1647 = vrot.lane.b32.xlu0 %v1637, 64
      %v1648 = vpop.permute.xlu0 %1647
      %1649 = vrot.lane.b32.xlu0 %v1638, 64
      %v1650 = vpop.permute.xlu0 %1649
      %1651 = vrot.lane.b32.xlu0 %v1639, 64
      %v1652 = vpop.permute.xlu0 %1651
      %1653 = vrot.lane.b32.xlu0 %v1640, 64
      %v1654 = vpop.permute.xlu0 %1653
      %1655 = vrot.lane.b32.xlu0 %v1641, 64
      %v1656 = vpop.permute.xlu0 %1655
      %1657 = vrot.lane.b32.xlu0 %v1642, 64
      %v1658 = vpop.permute.xlu0 %1657
      %v1659 = vunpack.c.l.b16 %v1478
      %v1660 = vunpack.c.l.b16 %v1492
      %v1661 = vpack.c.b16 %v1571, %v1570
      %v1662 = vpack.c.b16 %v1573, %v1572
      %v1663 = vpack.c.b16 %v1575, %v1574
      %v1664 = vpack.c.b16 %v1659, %v1576
      %v1665 = vpack.c.b16 %v1579, %v1578
      %v1666 = vpack.c.b16 %v1581, %v1580
      %v1667 = vpack.c.b16 %v1583, %v1582
      %v1668 = vpack.c.b16 %v1660, %v1584
      %v1669 = vunpack.c.l.b16 %v1500
      %v1670 = vunpack.c.l.b16 %v1504
      %v1671 = vpack.c.b16 %v1611, %v1610
      %v1672 = vpack.c.b16 %v1613, %v1612
      %v1673 = vpack.c.b16 %v1615, %v1614
      %v1674 = vpack.c.b16 %v1669, %v1616
      %v1675 = vpack.c.b16 %v1619, %v1618
      %v1676 = vpack.c.b16 %v1621, %v1620
      %v1677 = vpack.c.b16 %v1623, %v1622
      %v1678 = vpack.c.b16 %v1670, %v1624
      %1679 = vrot.lane.b32.xlu0 %v1671, 64
      %v1680 = vpop.permute.xlu0 %1679
      %1681 = vrot.lane.b32.xlu0 %v1672, 64
      %v1682 = vpop.permute.xlu0 %1681
      %1683 = vrot.lane.b32.xlu0 %v1673, 64
      %v1684 = vpop.permute.xlu0 %1683
      %1685 = vrot.lane.b32.xlu0 %v1674, 64
      %v1686 = vpop.permute.xlu0 %1685
      %1687 = vrot.lane.b32.xlu0 %v1675, 64
      %v1688 = vpop.permute.xlu0 %1687
      %1689 = vrot.lane.b32.xlu0 %v1676, 64
      %v1690 = vpop.permute.xlu0 %1689
      %1691 = vrot.lane.b32.xlu0 %v1677, 64
      %v1692 = vpop.permute.xlu0 %1691
      %1693 = vrot.lane.b32.xlu0 %v1678, 64
      %v1694 = vpop.permute.xlu0 %1693
      %v1695 = vunpack.c.l.b16 %v1117
      %v1696 = vunpack.c.l.b16 %v1137
      %v1697 = vpack.c.b16 %v1695, %v1633
      %v1698 = vpack.c.b16 %v1696, %v1634
      %v1699 = vunpack.c.l.b16 %v1518
      %v1700 = vunpack.c.l.b16 %v1532
      %v1701 = vpack.c.b16 %v1699, %v1659
      %v1702 = vpack.c.b16 %v1700, %v1660
      %1703 = vrot.lane.b32.xlu0 %v1701, 64
      %v1704 = vpop.permute.xlu0 %1703
      %1705 = vrot.lane.b32.xlu0 %v1702, 64
      %v1706 = vpop.permute.xlu0 %1705
      %v1707 = vunpack.c.l.b16 %v1540
      %v1708 = vunpack.c.l.b16 %v1544
      %v1709 = vpack.c.b16 %v1707, %v1669
      %v1710 = vpack.c.b16 %v1708, %v1670
      %vm1711 = vcmask 523264
      %v1714 = vsel %vm1711, %v1561, %v1594
      %v1718 = vsel %vm1711, %v1562, %v1596
      %v1722 = vsel %vm1711, %v1563, %v1598
      %v1726 = vsel %vm1711, %v1564, %v1600
      %v1730 = vsel %vm1711, %v1565, %v1602
      %v1734 = vsel %vm1711, %v1566, %v1604
      %v1738 = vsel %vm1711, %v1567, %v1606
      %v1742 = vsel %vm1711, %v1568, %v1608
      %v1746 = vsel %vm1711, %v1625, %v1644
      %v1750 = vsel %vm1711, %v1626, %v1646
      %v1754 = vsel %vm1711, %v1627, %v1648
      %v1758 = vsel %vm1711, %v1628, %v1650
      %v1762 = vsel %vm1711, %v1629, %v1652
      %v1766 = vsel %vm1711, %v1630, %v1654
      %v1770 = vsel %vm1711, %v1631, %v1656
      %v1774 = vsel %vm1711, %v1632, %v1658
      %v1778 = vsel %vm1711, %v1661, %v1680
      %v1782 = vsel %vm1711, %v1662, %v1682
      %v1786 = vsel %vm1711, %v1663, %v1684
      %v1790 = vsel %vm1711, %v1664, %v1686
      %v1794 = vsel %vm1711, %v1665, %v1688
      %v1798 = vsel %vm1711, %v1666, %v1690
      %v1802 = vsel %vm1711, %v1667, %v1692
      %v1806 = vsel %vm1711, %v1668, %v1694
      %v1810 = vsel %vm1711, %v1697, %v1704
      %v1814 = vsel %vm1711, %v1698, %v1706
      %v1816 = vld [vmem:[%s1] sm:$0xf]
      %v1817 = vld [vmem:[%s1 + $0x4] sm:$0xf]
      %v1818 = vld [vmem:[%s1 + $0x8] sm:$0xf]
      %v1819 = vld [vmem:[%s1 + $0xc] sm:$0xf]
      %v1820 = vld [vmem:[%s1 + $0x10] sm:$0xf]
      %v1821 = vld [vmem:[%s1 + $0x14] sm:$0xf]
      %v1822 = vld [vmem:[%s1 + $0x18] sm:$0xf]
      %v1823 = vld [vmem:[%s1 + $0x1c] sm:$0xf]
      %v1824 = vld [vmem:[%s1 + $0x20] sm:$0xf]
      %v1825 = vld [vmem:[%s1 + $0x24] sm:$0xf]
      %v1826 = vld [vmem:[%s1 + $0x28] sm:$0xf]
      %v1827 = vld [vmem:[%s1 + $0x2c] sm:$0xf]
      %v1828 = vld [vmem:[%s1 + $0x30] sm:$0xf]
      %v1829 = vld [vmem:[%s1 + $0x34] sm:$0xf]
      %v1830 = vld [vmem:[%s1 + $0x38] sm:$0xf]
      %v1831 = vld [vmem:[%s1 + $0x3c] sm:$0xf]
      %v1832 = vld [vmem:[%s1 + $0x40] sm:$0xf]
      %v1833 = vld [vmem:[%s1 + $0x44] sm:$0xf]
      %v1834 = vld [vmem:[%s1 + $0x48] sm:$0xf]
      %v1835 = vld [vmem:[%s1 + $0x4c] sm:$0xf]
      %v1836 = vld [vmem:[%s1 + $0x50] sm:$0xf]
      %v1837 = vld [vmem:[%s1 + $0x54] sm:$0xf]
      %v1838 = vld [vmem:[%s1 + $0x58] sm:$0xf]
      %v1839 = vld [vmem:[%s1 + $0x5c] sm:$0xf]
      %v1840 = vld [vmem:[%s1 + $0x60] sm:$0xf]
      %v1841 = vld [vmem:[%s1 + $0x64] sm:$0xf]
      %v1842 = vld [vmem:[%s1 + $0x68] sm:$0xf]
      %v1843 = vld [vmem:[%s1 + $0x6c] sm:$0xf]
      %v1844 = vld [vmem:[%s1 + $0x70] sm:$0xf]
      %v1845 = vld [vmem:[%s1 + $0x74] sm:$0xf]
      %v1846 = vld [vmem:[%s1 + $0x78] sm:$0xf]
      %v1847 = vld [vmem:[%s1 + $0x7c] sm:$0xf]
      %v1848 = vld [vmem:[%s1 + $0x80] sm:$0xf]
      %v1849 = vld [vmem:[%s1 + $0x84] sm:$0xf]
      %v1850 = vld [vmem:[%s1 + $0x88] sm:$0xf]
      %v1851 = vld [vmem:[%s1 + $0x8c] sm:$0xf]
      %v1852 = vld [vmem:[%s1 + $0x90] sm:$0xf]
      %v1853 = vld [vmem:[%s1 + $0x94] sm:$0xf]
      %v1854 = vld [vmem:[%s1 + $0x98] sm:$0xf]
      %v1855 = vld [vmem:[%s1 + $0x9c] sm:$0xf]
      %v1856 = vld [vmem:[%s1 + $0xa0] sm:$0xf]
      %v1857 = vld [vmem:[%s1 + $0xa4] sm:$0xf]
      %v1858 = vld [vmem:[%s1 + $0xa8] sm:$0xf]
      %v1859 = vld [vmem:[%s1 + $0xac] sm:$0xf]
      %v1860 = vld [vmem:[%s1 + $0xb0] sm:$0xf]
      %v1861 = vld [vmem:[%s1 + $0xb4] sm:$0xf]
      %v1862 = vld [vmem:[%s1 + $0xb8] sm:$0xf]
      %v1863 = vld [vmem:[%s1 + $0xbc] sm:$0xf]
      %v1864 = vld [vmem:[%s1 + $0xc0] sm:$0xf]
      %v1865 = vld [vmem:[%s1 + $0xc4] sm:$0xf]
      %v1866 = vld [vmem:[%s1 + $0xc8] sm:$0xf]
      %v1867 = vld [vmem:[%s1 + $0xcc] sm:$0xf]
      %v1868 = vld [vmem:[%s1 + $0xd0] sm:$0xf]
      %v1869 = vld [vmem:[%s1 + $0xd4] sm:$0xf]
      %v1870 = vld [vmem:[%s1 + $0xd8] sm:$0xf]
      %v1871 = vld [vmem:[%s1 + $0xdc] sm:$0xf]
      %v1872 = vld [vmem:[%s1 + $0xe0] sm:$0xf]
      %v1873 = vld [vmem:[%s1 + $0xe4] sm:$0xf]
      %v1874 = vld [vmem:[%s1 + $0xe8] sm:$0xf]
      %v1875 = vld [vmem:[%s1 + $0xec] sm:$0xf]
      %v1876 = vld [vmem:[%s1 + $0xf0] sm:$0xf]
      %v1877 = vld [vmem:[%s1 + $0xf4] sm:$0xf]
      %v1878 = vld [vmem:[%s1 + $0xf8] sm:$0xf]
      %v1879 = vld [vmem:[%s1 + $0xfc] sm:$0xf]
      %v1880 = vld [vmem:[%s1 + $0x100] sm:$0xf]
      %v1881 = vld [vmem:[%s1 + $0x104] sm:$0xf]
      %v1882 = vld [vmem:[%s1 + $0x108] sm:$0xf]
      %v1883 = vld [vmem:[%s1 + $0x10c] sm:$0xf]
      %v1884 = vld [vmem:[%s1 + $0x110] sm:$0xf]
      %v1885 = vld [vmem:[%s1 + $0x114] sm:$0xf]
      %v1886 = vld [vmem:[%s1 + $0x118] sm:$0xf]
      %v1887 = vld [vmem:[%s1 + $0x11c] sm:$0xf]
      %v1888 = vld [vmem:[%s2] sm:$0x1]
      %v1890 = vperm.slane %v1888, 0
      %v1964 = vunpack.c.l.b16 %v1816
      %v1965 = vunpack.c.l.b16 %v1817
      %v1966 = vunpack.c.l.b16 %v1818
      %v1967 = vunpack.c.l.b16 %v1819
      %v1968 = vunpack.c.l.b16 %v1820
      %v1969 = vunpack.c.l.b16 %v1821
      %v1970 = vunpack.c.l.b16 %v1822
      %v1971 = vunpack.c.l.b16 %v1823
      %v1972 = vunpack.c.l.b16 %v1824
      %v1973 = vunpack.c.l.b16 %v1825
      %v1974 = vunpack.c.l.b16 %v1826
      %v1975 = vunpack.c.l.b16 %v1827
      %v1976 = vunpack.c.l.b16 %v1828
      %v1977 = vunpack.c.l.b16 %v1829
      %v1978 = vunpack.c.l.b16 %v1830
      %v1979 = vunpack.c.l.b16 %v1831
      %v1980 = vunpack.c.l.b16 %v1832
      %v1981 = vunpack.c.l.b16 %v1833
      %v1982 = vunpack.c.l.b16 %v1834
      %v1983 = vunpack.c.l.b16 %v1835
      %v1984 = vunpack.c.l.b16 %v1836
      %v1985 = vunpack.c.l.b16 %v1837
      %v1986 = vunpack.c.l.b16 %v1838
      %v1987 = vunpack.c.l.b16 %v1839
      %v1988 = vunpack.c.l.b16 %v1840
      %v1989 = vunpack.c.l.b16 %v1841
      %v1990 = vunpack.c.l.b16 %v1842
      %v1991 = vunpack.c.l.b16 %v1843
      %v1992 = vunpack.c.l.b16 %v1844
      %v1993 = vunpack.c.l.b16 %v1845
      %v1994 = vunpack.c.l.b16 %v1846
      %v1995 = vunpack.c.l.b16 %v1847
      %v1996 = vunpack.c.l.b16 %v1848
      %v1997 = vunpack.c.l.b16 %v1849
      %v1998 = vunpack.c.l.b16 %v1850
      %v1999 = vunpack.c.l.b16 %v1851
      %v2000 = vunpack.c.l.b16 %v1852
      %v2001 = vunpack.c.l.b16 %v1853
      %v2002 = vunpack.c.l.b16 %v1854
      %v2003 = vunpack.c.l.b16 %v1855
      %v2004 = vunpack.c.l.b16 %v1856
      %v2005 = vunpack.c.l.b16 %v1857
      %v2006 = vunpack.c.l.b16 %v1858
      %v2007 = vunpack.c.l.b16 %v1859
      %v2008 = vunpack.c.l.b16 %v1860
      %v2009 = vunpack.c.l.b16 %v1861
      %v2010 = vunpack.c.l.b16 %v1862
      %v2011 = vunpack.c.l.b16 %v1863
      %v2012 = vunpack.c.l.b16 %v1864
      %v2013 = vunpack.c.l.b16 %v1865
      %v2014 = vunpack.c.l.b16 %v1866
      %v2015 = vunpack.c.l.b16 %v1867
      %v2016 = vunpack.c.l.b16 %v1868
      %v2017 = vunpack.c.l.b16 %v1869
      %v2018 = vunpack.c.l.b16 %v1870
      %v2019 = vunpack.c.l.b16 %v1871
      %v2020 = vunpack.c.l.b16 %v1872
      %v2021 = vunpack.c.l.b16 %v1873
      %v2022 = vunpack.c.l.b16 %v1874
      %v2023 = vunpack.c.l.b16 %v1875
      %v2024 = vunpack.c.l.b16 %v1876
      %v2025 = vunpack.c.l.b16 %v1877
      %v2026 = vunpack.c.l.b16 %v1878
      %v2027 = vunpack.c.l.b16 %v1879
      %v2028 = vunpack.c.l.b16 %v1880
      %v2029 = vunpack.c.l.b16 %v1881
      %v2030 = vunpack.c.l.b16 %v1882
      %v2031 = vunpack.c.l.b16 %v1883
      %v2032 = vunpack.c.l.b16 %v1884
      %v2033 = vunpack.c.l.b16 %v1885
      %v2034 = vunpack.c.l.b16 %v1886
      %v2035 = vunpack.c.l.b16 %v1887
      %v2036 = vpack.c.b16 %v1965, %v1964
      %v2037 = vpack.c.b16 %v1967, %v1966
      %v2038 = vpack.c.b16 %v1969, %v1968
      %v2039 = vpack.c.b16 %v1971, %v1970
      %v2040 = vpack.c.b16 %v1973, %v1972
      %v2041 = vpack.c.b16 %v1975, %v1974
      %v2042 = vpack.c.b16 %v1977, %v1976
      %v2043 = vpack.c.b16 %v1979, %v1978
      %v2044 = vpack.c.b16 %v1981, %v1980
      %v2045 = vpack.c.b16 %v1983, %v1982
      %v2046 = vpack.c.b16 %v1985, %v1984
      %v2047 = vpack.c.b16 %v1987, %v1986
      %v2048 = vpack.c.b16 %v1989, %v1988
      %v2049 = vpack.c.b16 %v1991, %v1990
      %v2050 = vpack.c.b16 %v1993, %v1992
      %v2051 = vpack.c.b16 %v1995, %v1994
      %v2052 = vpack.c.b16 %v1997, %v1996
      %v2053 = vpack.c.b16 %v1999, %v1998
      %v2054 = vpack.c.b16 %v2001, %v2000
      %v2055 = vpack.c.b16 %v2003, %v2002
      %v2056 = vpack.c.b16 %v2005, %v2004
      %v2057 = vpack.c.b16 %v2007, %v2006
      %v2058 = vpack.c.b16 %v2009, %v2008
      %v2059 = vpack.c.b16 %v2011, %v2010
      %v2060 = vpack.c.b16 %v2013, %v2012
      %v2061 = vpack.c.b16 %v2015, %v2014
      %v2062 = vpack.c.b16 %v2017, %v2016
      %v2063 = vpack.c.b16 %v2019, %v2018
      %v2064 = vpack.c.b16 %v2021, %v2020
      %v2065 = vpack.c.b16 %v2023, %v2022
      %v2066 = vpack.c.b16 %v2025, %v2024
      %v2067 = vpack.c.b16 %v2027, %v2026
      %v2068 = vpack.c.b16 %v2029, %v2028
      %v2069 = vpack.c.b16 %v2031, %v2030
      %v2070 = vpack.c.b16 %v2033, %v2032
      %v2071 = vpack.c.b16 %v2035, %v2034
      %v2108 = vsel %vm1711, %v1626, 0
      %v2110 = vsel %vm1711, %v1627, 0
      %v2112 = vsel %vm1711, %v1628, 0
      %v2115 = vsel %vm1711, %v1709, 0
      %v2117 = vsel %vm1711, %v1630, 0
      %v2119 = vsel %vm1711, %v1631, 0
      %v2121 = vsel %vm1711, %v1632, 0
      %v2124 = vsel %vm1711, %v1710, 0
      %2126 = vmatpush.bf16.msra.mxu0 %v2043
      %2127 = vmatpush.bf16.msra.mxu0 %v2042
      %2128 = vmatpush.bf16.msra.mxu0 %v2041
      %2129 = vmatpush.bf16.msra.mxu0 %v2040
      %2130 = vmatpush.bf16.msra.mxu0 %v2039
      %2131 = vmatpush.bf16.msra.mxu0 %v2038
      %2132 = vmatpush.bf16.msra.mxu0 %v2037
      %2133 = vmatpush.bf16.msra.mxu0 %v2036
      %2134 = vmatmul.bf16.gmra.mxu0 %v1714
      %v2135 = vpop.f32.mrf.mxu0
      %v2136 = vadd.f32 %v1890, %v2135
      %v2137 = vpop.f32.mrf.mxu0
      %v2138 = vadd.f32 %v1890, %v2137
      %2139 = vmatmul.bf16.gmra.mxu0 %v1718
      %v2140 = vpop.f32.mrf.mxu0
      %v2141 = vadd.f32 %v1890, %v2140
      %v2142 = vpop.f32.mrf.mxu0
      %v2143 = vadd.f32 %v1890, %v2142
      %2144 = vmatmul.bf16.gmra.mxu0 %v1722
      %v2145 = vpop.f32.mrf.mxu0
      %v2146 = vadd.f32 %v1890, %v2145
      %v2147 = vpop.f32.mrf.mxu0
      %v2148 = vadd.f32 %v1890, %v2147
      %2149 = vmatmul.bf16.gmra.mxu0 %v1726
      %v2150 = vpop.f32.mrf.mxu0
      %v2151 = vadd.f32 %v1890, %v2150
      %v2152 = vpop.f32.mrf.mxu0
      %v2153 = vadd.f32 %v1890, %v2152
      %2154 = vmatmul.bf16.gmra.mxu0 %v1730
      %v2155 = vpop.f32.mrf.mxu0
      %v2156 = vadd.f32 %v1890, %v2155
      %v2157 = vpop.f32.mrf.mxu0
      %v2158 = vadd.f32 %v1890, %v2157
      %2159 = vmatmul.bf16.gmra.mxu0 %v1734
      %v2160 = vpop.f32.mrf.mxu0
      %v2161 = vadd.f32 %v1890, %v2160
      %v2162 = vpop.f32.mrf.mxu0
      %v2163 = vadd.f32 %v1890, %v2162
      %2164 = vmatmul.bf16.gmra.mxu0 %v1738
      %v2165 = vpop.f32.mrf.mxu0
      %v2166 = vadd.f32 %v1890, %v2165
      %v2167 = vpop.f32.mrf.mxu0
      %v2168 = vadd.f32 %v1890, %v2167
      %2169 = vmatmul.bf16.gmra.mxu0 %v1742
      %v2170 = vpop.f32.mrf.mxu0
      %v2171 = vadd.f32 %v1890, %v2170
      %v2172 = vpop.f32.mrf.mxu0
      %v2173 = vadd.f32 %v1890, %v2172
      %2174 = vdwg.mxu0
      %2175 = vmatpush.bf16.msra.mxu0 %v2051
      %2176 = vmatpush.bf16.msra.mxu0 %v2050
      %2177 = vmatpush.bf16.msra.mxu0 %v2049
      %2178 = vmatpush.bf16.msra.mxu0 %v2048
      %2179 = vmatpush.bf16.msra.mxu0 %v2047
      %2180 = vmatpush.bf16.msra.mxu0 %v2046
      %2181 = vmatpush.bf16.msra.mxu0 %v2045
      %2182 = vmatpush.bf16.msra.mxu0 %v2044
      %2183 = vmatmul.bf16.gmra.mxu0 %v1746
      %v2184 = vpop.f32.mrf.mxu0
      %v2185 = vadd.f32 %v2136, %v2184
      %v2186 = vpop.f32.mrf.mxu0
      %v2187 = vadd.f32 %v2138, %v2186
      %2188 = vmatmul.bf16.gmra.mxu0 %v1750
      %v2189 = vpop.f32.mrf.mxu0
      %v2190 = vadd.f32 %v2141, %v2189
      %v2191 = vpop.f32.mrf.mxu0
      %v2192 = vadd.f32 %v2143, %v2191
      %2193 = vmatmul.bf16.gmra.mxu0 %v1754
      %v2194 = vpop.f32.mrf.mxu0
      %v2195 = vadd.f32 %v2146, %v2194
      %v2196 = vpop.f32.mrf.mxu0
      %v2197 = vadd.f32 %v2148, %v2196
      %2198 = vmatmul.bf16.gmra.mxu0 %v1758
      %v2199 = vpop.f32.mrf.mxu0
      %v2200 = vadd.f32 %v2151, %v2199
      %v2201 = vpop.f32.mrf.mxu0
      %v2202 = vadd.f32 %v2153, %v2201
      %2203 = vmatmul.bf16.gmra.mxu0 %v1762
      %v2204 = vpop.f32.mrf.mxu0
      %v2205 = vadd.f32 %v2156, %v2204
      %v2206 = vpop.f32.mrf.mxu0
      %v2207 = vadd.f32 %v2158, %v2206
      %2208 = vmatmul.bf16.gmra.mxu0 %v1766
      %v2209 = vpop.f32.mrf.mxu0
      %v2210 = vadd.f32 %v2161, %v2209
      %v2211 = vpop.f32.mrf.mxu0
      %v2212 = vadd.f32 %v2163, %v2211
      %2213 = vmatmul.bf16.gmra.mxu0 %v1770
      %v2214 = vpop.f32.mrf.mxu0
      %v2215 = vadd.f32 %v2166, %v2214
      %v2216 = vpop.f32.mrf.mxu0
      %v2217 = vadd.f32 %v2168, %v2216
      %2218 = vmatmul.bf16.gmra.mxu0 %v1774
      %v2219 = vpop.f32.mrf.mxu0
      %v2220 = vadd.f32 %v2171, %v2219
      %v2221 = vpop.f32.mrf.mxu0
      %v2222 = vadd.f32 %v2173, %v2221
      %2223 = vdwg.mxu0
      %2224 = vmatpush.bf16.msra.mxu0 %v2059
      %2225 = vmatpush.bf16.msra.mxu0 %v2058
      %2226 = vmatpush.bf16.msra.mxu0 %v2057
      %2227 = vmatpush.bf16.msra.mxu0 %v2056
      %2228 = vmatpush.bf16.msra.mxu0 %v2055
      %2229 = vmatpush.bf16.msra.mxu0 %v2054
      %2230 = vmatpush.bf16.msra.mxu0 %v2053
      %2231 = vmatpush.bf16.msra.mxu0 %v2052
      %2232 = vmatmul.bf16.gmra.mxu0 %v1778
      %v2233 = vpop.f32.mrf.mxu0
      %v2234 = vadd.f32 %v2185, %v2233
      %v2235 = vpop.f32.mrf.mxu0
      %v2236 = vadd.f32 %v2187, %v2235
      %2237 = vmatmul.bf16.gmra.mxu0 %v1782
      %v2238 = vpop.f32.mrf.mxu0
      %v2239 = vadd.f32 %v2190, %v2238
      %v2240 = vpop.f32.mrf.mxu0
      %v2241 = vadd.f32 %v2192, %v2240
      %2242 = vmatmul.bf16.gmra.mxu0 %v1786
      %v2243 = vpop.f32.mrf.mxu0
      %v2244 = vadd.f32 %v2195, %v2243
      %v2245 = vpop.f32.mrf.mxu0
      %v2246 = vadd.f32 %v2197, %v2245
      %2247 = vmatmul.bf16.gmra.mxu0 %v1790
      %v2248 = vpop.f32.mrf.mxu0
      %v2249 = vadd.f32 %v2200, %v2248
      %v2250 = vpop.f32.mrf.mxu0
      %v2251 = vadd.f32 %v2202, %v2250
      %2252 = vmatmul.bf16.gmra.mxu0 %v1794
      %v2253 = vpop.f32.mrf.mxu0
      %v2254 = vadd.f32 %v2205, %v2253
      %v2255 = vpop.f32.mrf.mxu0
      %v2256 = vadd.f32 %v2207, %v2255
      %2257 = vmatmul.bf16.gmra.mxu0 %v1798
      %v2258 = vpop.f32.mrf.mxu0
      %v2259 = vadd.f32 %v2210, %v2258
      %v2260 = vpop.f32.mrf.mxu0
      %v2261 = vadd.f32 %v2212, %v2260
      %2262 = vmatmul.bf16.gmra.mxu0 %v1802
      %v2263 = vpop.f32.mrf.mxu0
      %v2264 = vadd.f32 %v2215, %v2263
      %v2265 = vpop.f32.mrf.mxu0
      %v2266 = vadd.f32 %v2217, %v2265
      %2267 = vmatmul.bf16.gmra.mxu0 %v1806
      %v2268 = vpop.f32.mrf.mxu0
      %v2269 = vadd.f32 %v2220, %v2268
      %v2270 = vpop.f32.mrf.mxu0
      %v2271 = vadd.f32 %v2222, %v2270
      %2272 = vdwg.mxu0
      %2273 = vmatpush.bf16.msra.mxu0 %v2067
      %2274 = vmatpush.bf16.msra.mxu0 %v2066
      %2275 = vmatpush.bf16.msra.mxu0 %v2065
      %2276 = vmatpush.bf16.msra.mxu0 %v2064
      %2277 = vmatpush.bf16.msra.mxu0 %v2063
      %2278 = vmatpush.bf16.msra.mxu0 %v2062
      %2279 = vmatpush.bf16.msra.mxu0 %v2061
      %2280 = vmatpush.bf16.msra.mxu0 %v2060
      %2281 = vmatmul.bf16.gmra.mxu0 %v1718
      %v2282 = vpop.f32.mrf.mxu0
      %v2283 = vadd.f32 %v2234, %v2282
      %v2284 = vpop.f32.mrf.mxu0
      %v2285 = vadd.f32 %v2236, %v2284
      %2286 = vmatmul.bf16.gmra.mxu0 %v1722
      %v2287 = vpop.f32.mrf.mxu0
      %v2288 = vadd.f32 %v2239, %v2287
      %v2289 = vpop.f32.mrf.mxu0
      %v2290 = vadd.f32 %v2241, %v2289
      %2291 = vmatmul.bf16.gmra.mxu0 %v1726
      %v2292 = vpop.f32.mrf.mxu0
      %v2293 = vadd.f32 %v2244, %v2292
      %v2294 = vpop.f32.mrf.mxu0
      %v2295 = vadd.f32 %v2246, %v2294
      %2296 = vmatmul.bf16.gmra.mxu0 %v1810
      %v2297 = vpop.f32.mrf.mxu0
      %v2298 = vadd.f32 %v2249, %v2297
      %v2299 = vpop.f32.mrf.mxu0
      %v2300 = vadd.f32 %v2251, %v2299
      %2301 = vmatmul.bf16.gmra.mxu0 %v1734
      %v2302 = vpop.f32.mrf.mxu0
      %v2303 = vadd.f32 %v2254, %v2302
      %v2304 = vpop.f32.mrf.mxu0
      %v2305 = vadd.f32 %v2256, %v2304
      %2306 = vmatmul.bf16.gmra.mxu0 %v1738
      %v2307 = vpop.f32.mrf.mxu0
      %v2308 = vadd.f32 %v2259, %v2307
      %v2309 = vpop.f32.mrf.mxu0
      %v2310 = vadd.f32 %v2261, %v2309
      %2311 = vmatmul.bf16.gmra.mxu0 %v1742
      %v2312 = vpop.f32.mrf.mxu0
      %v2313 = vadd.f32 %v2264, %v2312
      %v2314 = vpop.f32.mrf.mxu0
      %v2315 = vadd.f32 %v2266, %v2314
      %2316 = vmatmul.bf16.gmra.mxu0 %v1814
      %v2317 = vpop.f32.mrf.mxu0
      %v2318 = vadd.f32 %v2269, %v2317
      %v2319 = vpop.f32.mrf.mxu0
      %v2320 = vadd.f32 %v2271, %v2319
      %2321 = vdwg.mxu0
      %2322 = vmatpush.bf16.msra.mxu0 0
      %2323 = vmatpush.bf16.msra.mxu0 0
      %2324 = vmatpush.bf16.msra.mxu0 0
      %2325 = vmatpush.bf16.msra.mxu0 0
      %2326 = vmatpush.bf16.msra.mxu0 %v2071
      %2327 = vmatpush.bf16.msra.mxu0 %v2070
      %2328 = vmatpush.bf16.msra.mxu0 %v2069
      %2329 = vmatpush.bf16.msra.mxu0 %v2068
      %2330 = vmatmul.bf16.gmra.mxu0 %v2108
      %v2331 = vpop.f32.mrf.mxu0
      %v2332 = vadd.f32 %v2283, %v2331
      %v2333 = vpop.f32.mrf.mxu0
      %v2334 = vadd.f32 %v2285, %v2333
      %2335 = vmatmul.bf16.gmra.mxu0 %v2110
      %v2336 = vpop.f32.mrf.mxu0
      %v2337 = vadd.f32 %v2288, %v2336
      %v2338 = vpop.f32.mrf.mxu0
      %v2339 = vadd.f32 %v2290, %v2338
      %2340 = vmatmul.bf16.gmra.mxu0 %v2112
      %v2341 = vpop.f32.mrf.mxu0
      %v2342 = vadd.f32 %v2293, %v2341
      %v2343 = vpop.f32.mrf.mxu0
      %v2344 = vadd.f32 %v2295, %v2343
      %2345 = vmatmul.bf16.gmra.mxu0 %v2115
      %v2346 = vpop.f32.mrf.mxu0
      %v2347 = vadd.f32 %v2298, %v2346
      %v2348 = vpop.f32.mrf.mxu0
      %v2349 = vadd.f32 %v2300, %v2348
      %2350 = vmatmul.bf16.gmra.mxu0 %v2117
      %v2351 = vpop.f32.mrf.mxu0
      %v2352 = vadd.f32 %v2303, %v2351
      %v2353 = vpop.f32.mrf.mxu0
      %v2354 = vadd.f32 %v2305, %v2353
      %2355 = vmatmul.bf16.gmra.mxu0 %v2119
      %v2356 = vpop.f32.mrf.mxu0
      %v2357 = vadd.f32 %v2308, %v2356
      %v2358 = vpop.f32.mrf.mxu0
      %v2359 = vadd.f32 %v2310, %v2358
      %2360 = vmatmul.bf16.gmra.mxu0 %v2121
      %v2361 = vpop.f32.mrf.mxu0
      %v2362 = vadd.f32 %v2313, %v2361
      %v2363 = vpop.f32.mrf.mxu0
      %v2364 = vadd.f32 %v2315, %v2363
      %2365 = vmatmul.bf16.gmra.mxu0 %v2124
      %v2366 = vpop.f32.mrf.mxu0
      %v2367 = vadd.f32 %v2318, %v2366
      %v2368 = vpop.f32.mrf.mxu0
      %v2369 = vadd.f32 %v2320, %v2368
      %2370 = vdwg.mxu0
      %v2371 = vxor.u32 %v2332, 2147483648
      %v2372 = vxor.u32 %v2334, 2147483648
      %v2373 = vxor.u32 %v2337, 2147483648
      %v2374 = vxor.u32 %v2339, 2147483648
      %v2375 = vxor.u32 %v2342, 2147483648
      %v2376 = vxor.u32 %v2344, 2147483648
      %v2377 = vxor.u32 %v2347, 2147483648
      %v2378 = vxor.u32 %v2349, 2147483648
      %v2379 = vxor.u32 %v2352, 2147483648
      %v2380 = vxor.u32 %v2354, 2147483648
      %v2381 = vxor.u32 %v2357, 2147483648
      %v2382 = vxor.u32 %v2359, 2147483648
      %v2383 = vxor.u32 %v2362, 2147483648
      %v2384 = vxor.u32 %v2364, 2147483648
      %v2385 = vxor.u32 %v2367, 2147483648
      %v2386 = vxor.u32 %v2369, 2147483648
      %v2387 = vmul.f32 %v2371, 1.442695
      %v2388 = vpow.pop %v2387
      %v2389 = vmul.f32 %v2372, 1.442695
      %v2390 = vpow.pop %v2389
      %v2391 = vmul.f32 %v2373, 1.442695
      %v2392 = vpow.pop %v2391
      %v2393 = vmul.f32 %v2374, 1.442695
      %v2394 = vpow.pop %v2393
      %v2395 = vmul.f32 %v2375, 1.442695
      %v2396 = vpow.pop %v2395
      %v2397 = vmul.f32 %v2376, 1.442695
      %v2398 = vpow.pop %v2397
      %v2399 = vmul.f32 %v2377, 1.442695
      %v2400 = vpow.pop %v2399
      %v2401 = vmul.f32 %v2378, 1.442695
      %v2402 = vpow.pop %v2401
      %v2403 = vmul.f32 %v2379, 1.442695
      %v2404 = vpow.pop %v2403
      %v2405 = vmul.f32 %v2380, 1.442695
      %v2406 = vpow.pop %v2405
      %v2407 = vmul.f32 %v2381, 1.442695
      %v2408 = vpow.pop %v2407
      %v2409 = vmul.f32 %v2382, 1.442695
      %v2410 = vpow.pop %v2409
      %v2411 = vmul.f32 %v2383, 1.442695
      %v2412 = vpow.pop %v2411
      %v2413 = vmul.f32 %v2384, 1.442695
      %v2414 = vpow.pop %v2413
      %v2415 = vmul.f32 %v2385, 1.442695
      %v2416 = vpow.pop %v2415
      %v2417 = vmul.f32 %v2386, 1.442695
      %v2418 = vpow.pop %v2417
      %v2419 = vadd.f32 %v2388, 1.0
      %v2420 = vadd.f32 %v2390, 1.0
      %v2421 = vadd.f32 %v2392, 1.0
      %v2422 = vadd.f32 %v2394, 1.0
      %v2423 = vadd.f32 %v2396, 1.0
      %v2424 = vadd.f32 %v2398, 1.0
      %v2425 = vadd.f32 %v2400, 1.0
      %v2426 = vadd.f32 %v2402, 1.0
      %v2427 = vadd.f32 %v2404, 1.0
      %v2428 = vadd.f32 %v2406, 1.0
      %v2429 = vadd.f32 %v2408, 1.0
      %v2430 = vadd.f32 %v2410, 1.0
      %v2431 = vadd.f32 %v2412, 1.0
      %v2432 = vadd.f32 %v2414, 1.0
      %v2433 = vadd.f32 %v2416, 1.0
      %v2434 = vadd.f32 %v2418, 1.0
      %v2435 = vrcp.pop %v2419
      %v2436 = vmul.f32 %v2419, %v2435
      %v2437 = vsub.f32 1.0, %v2436
      %v2438 = vmul.f32 %v2435, %v2437
      %v2439 = vadd.f32 %v2435, %v2438
      %vm2440 = vweird.f32 %v2419
      %vm2441 = vweird.f32 %v2435
      %vm2442 = vmor %vm2440, %vm2441
      %v2443 = vsel %vm2442, %v2435, %v2439
      %v2444 = vand.u32 2147483647, %v2419
      %vm2445 = vcmp.eq.f32.partialorder %v2444, 8.507059e+37
      %v2446 = vand.u32 %v2419, 2147483648
      %v2447 = vor.u32 1.1754944e-38, %v2446
      %v2448 = vsel %vm2445, %v2447, %v2443
      %v2449 = vmul.f32 1.0, %v2448
      %v2450 = vrcp.pop %v2420
      %v2451 = vmul.f32 %v2420, %v2450
      %v2452 = vsub.f32 1.0, %v2451
      %v2453 = vmul.f32 %v2450, %v2452
      %v2454 = vadd.f32 %v2450, %v2453
      %vm2455 = vweird.f32 %v2420
      %vm2456 = vweird.f32 %v2450
      %vm2457 = vmor %vm2455, %vm2456
      %v2458 = vsel %vm2457, %v2450, %v2454
      %v2459 = vand.u32 2147483647, %v2420
      %vm2460 = vcmp.eq.f32.partialorder %v2459, 8.507059e+37
      %v2461 = vand.u32 %v2420, 2147483648
      %v2462 = vor.u32 1.1754944e-38, %v2461
      %v2463 = vsel %vm2460, %v2462, %v2458
      %v2464 = vmul.f32 1.0, %v2463
      %v2465 = vrcp.pop %v2421
      %v2466 = vmul.f32 %v2421, %v2465
      %v2467 = vsub.f32 1.0, %v2466
      %v2468 = vmul.f32 %v2465, %v2467
      %v2469 = vadd.f32 %v2465, %v2468
      %vm2470 = vweird.f32 %v2421
      %vm2471 = vweird.f32 %v2465
      %vm2472 = vmor %vm2470, %vm2471
      %v2473 = vsel %vm2472, %v2465, %v2469
      %v2474 = vand.u32 2147483647, %v2421
      %vm2475 = vcmp.eq.f32.partialorder %v2474, 8.507059e+37
      %v2476 = vand.u32 %v2421, 2147483648
      %v2477 = vor.u32 1.1754944e-38, %v2476
      %v2478 = vsel %vm2475, %v2477, %v2473
      %v2479 = vmul.f32 1.0, %v2478
      %v2480 = vrcp.pop %v2422
      %v2481 = vmul.f32 %v2422, %v2480
      %v2482 = vsub.f32 1.0, %v2481
      %v2483 = vmul.f32 %v2480, %v2482
      %v2484 = vadd.f32 %v2480, %v2483
      %vm2485 = vweird.f32 %v2422
      %vm2486 = vweird.f32 %v2480
      %vm2487 = vmor %vm2485, %vm2486
      %v2488 = vsel %vm2487, %v2480, %v2484
      %v2489 = vand.u32 2147483647, %v2422
      %vm2490 = vcmp.eq.f32.partialorder %v2489, 8.507059e+37
      %v2491 = vand.u32 %v2422, 2147483648
      %v2492 = vor.u32 1.1754944e-38, %v2491
      %v2493 = vsel %vm2490, %v2492, %v2488
      %v2494 = vmul.f32 1.0, %v2493
      %v2495 = vrcp.pop %v2423
      %v2496 = vmul.f32 %v2423, %v2495
      %v2497 = vsub.f32 1.0, %v2496
      %v2498 = vmul.f32 %v2495, %v2497
      %v2499 = vadd.f32 %v2495, %v2498
      %vm2500 = vweird.f32 %v2423
      %vm2501 = vweird.f32 %v2495
      %vm2502 = vmor %vm2500, %vm2501
      %v2503 = vsel %vm2502, %v2495, %v2499
      %v2504 = vand.u32 2147483647, %v2423
      %vm2505 = vcmp.eq.f32.partialorder %v2504, 8.507059e+37
      %v2506 = vand.u32 %v2423, 2147483648
      %v2507 = vor.u32 1.1754944e-38, %v2506
      %v2508 = vsel %vm2505, %v2507, %v2503
      %v2509 = vmul.f32 1.0, %v2508
      %v2510 = vrcp.pop %v2424
      %v2511 = vmul.f32 %v2424, %v2510
      %v2512 = vsub.f32 1.0, %v2511
      %v2513 = vmul.f32 %v2510, %v2512
      %v2514 = vadd.f32 %v2510, %v2513
      %vm2515 = vweird.f32 %v2424
      %vm2516 = vweird.f32 %v2510
      %vm2517 = vmor %vm2515, %vm2516
      %v2518 = vsel %vm2517, %v2510, %v2514
      %v2519 = vand.u32 2147483647, %v2424
      %vm2520 = vcmp.eq.f32.partialorder %v2519, 8.507059e+37
      %v2521 = vand.u32 %v2424, 2147483648
      %v2522 = vor.u32 1.1754944e-38, %v2521
      %v2523 = vsel %vm2520, %v2522, %v2518
      %v2524 = vmul.f32 1.0, %v2523
      %v2525 = vrcp.pop %v2425
      %v2526 = vmul.f32 %v2425, %v2525
      %v2527 = vsub.f32 1.0, %v2526
      %v2528 = vmul.f32 %v2525, %v2527
      %v2529 = vadd.f32 %v2525, %v2528
      %vm2530 = vweird.f32 %v2425
      %vm2531 = vweird.f32 %v2525
      %vm2532 = vmor %vm2530, %vm2531
      %v2533 = vsel %vm2532, %v2525, %v2529
      %v2534 = vand.u32 2147483647, %v2425
      %vm2535 = vcmp.eq.f32.partialorder %v2534, 8.507059e+37
      %v2536 = vand.u32 %v2425, 2147483648
      %v2537 = vor.u32 1.1754944e-38, %v2536
      %v2538 = vsel %vm2535, %v2537, %v2533
      %v2539 = vmul.f32 1.0, %v2538
      %v2540 = vrcp.pop %v2426
      %v2541 = vmul.f32 %v2426, %v2540
      %v2542 = vsub.f32 1.0, %v2541
      %v2543 = vmul.f32 %v2540, %v2542
      %v2544 = vadd.f32 %v2540, %v2543
      %vm2545 = vweird.f32 %v2426
      %vm2546 = vweird.f32 %v2540
      %vm2547 = vmor %vm2545, %vm2546
      %v2548 = vsel %vm2547, %v2540, %v2544
      %v2549 = vand.u32 2147483647, %v2426
      %vm2550 = vcmp.eq.f32.partialorder %v2549, 8.507059e+37
      %v2551 = vand.u32 %v2426, 2147483648
      %v2552 = vor.u32 1.1754944e-38, %v2551
      %v2553 = vsel %vm2550, %v2552, %v2548
      %v2554 = vmul.f32 1.0, %v2553
      %v2555 = vrcp.pop %v2427
      %v2556 = vmul.f32 %v2427, %v2555
      %v2557 = vsub.f32 1.0, %v2556
      %v2558 = vmul.f32 %v2555, %v2557
      %v2559 = vadd.f32 %v2555, %v2558
      %vm2560 = vweird.f32 %v2427
      %vm2561 = vweird.f32 %v2555
      %vm2562 = vmor %vm2560, %vm2561
      %v2563 = vsel %vm2562, %v2555, %v2559
      %v2564 = vand.u32 2147483647, %v2427
      %vm2565 = vcmp.eq.f32.partialorder %v2564, 8.507059e+37
      %v2566 = vand.u32 %v2427, 2147483648
      %v2567 = vor.u32 1.1754944e-38, %v2566
      %v2568 = vsel %vm2565, %v2567, %v2563
      %v2569 = vmul.f32 1.0, %v2568
      %v2570 = vrcp.pop %v2428
      %v2571 = vmul.f32 %v2428, %v2570
      %v2572 = vsub.f32 1.0, %v2571
      %v2573 = vmul.f32 %v2570, %v2572
      %v2574 = vadd.f32 %v2570, %v2573
      %vm2575 = vweird.f32 %v2428
      %vm2576 = vweird.f32 %v2570
      %vm2577 = vmor %vm2575, %vm2576
      %v2578 = vsel %vm2577, %v2570, %v2574
      %v2579 = vand.u32 2147483647, %v2428
      %vm2580 = vcmp.eq.f32.partialorder %v2579, 8.507059e+37
      %v2581 = vand.u32 %v2428, 2147483648
      %v2582 = vor.u32 1.1754944e-38, %v2581
      %v2583 = vsel %vm2580, %v2582, %v2578
      %v2584 = vmul.f32 1.0, %v2583
      %v2585 = vrcp.pop %v2429
      %v2586 = vmul.f32 %v2429, %v2585
      %v2587 = vsub.f32 1.0, %v2586
      %v2588 = vmul.f32 %v2585, %v2587
      %v2589 = vadd.f32 %v2585, %v2588
      %vm2590 = vweird.f32 %v2429
      %vm2591 = vweird.f32 %v2585
      %vm2592 = vmor %vm2590, %vm2591
      %v2593 = vsel %vm2592, %v2585, %v2589
      %v2594 = vand.u32 2147483647, %v2429
      %vm2595 = vcmp.eq.f32.partialorder %v2594, 8.507059e+37
      %v2596 = vand.u32 %v2429, 2147483648
      %v2597 = vor.u32 1.1754944e-38, %v2596
      %v2598 = vsel %vm2595, %v2597, %v2593
      %v2599 = vmul.f32 1.0, %v2598
      %v2600 = vrcp.pop %v2430
      %v2601 = vmul.f32 %v2430, %v2600
      %v2602 = vsub.f32 1.0, %v2601
      %v2603 = vmul.f32 %v2600, %v2602
      %v2604 = vadd.f32 %v2600, %v2603
      %vm2605 = vweird.f32 %v2430
      %vm2606 = vweird.f32 %v2600
      %vm2607 = vmor %vm2605, %vm2606
      %v2608 = vsel %vm2607, %v2600, %v2604
      %v2609 = vand.u32 2147483647, %v2430
      %vm2610 = vcmp.eq.f32.partialorder %v2609, 8.507059e+37
      %v2611 = vand.u32 %v2430, 2147483648
      %v2612 = vor.u32 1.1754944e-38, %v2611
      %v2613 = vsel %vm2610, %v2612, %v2608
      %v2614 = vmul.f32 1.0, %v2613
      %v2615 = vrcp.pop %v2431
      %v2616 = vmul.f32 %v2431, %v2615
      %v2617 = vsub.f32 1.0, %v2616
      %v2618 = vmul.f32 %v2615, %v2617
      %v2619 = vadd.f32 %v2615, %v2618
      %vm2620 = vweird.f32 %v2431
      %vm2621 = vweird.f32 %v2615
      %vm2622 = vmor %vm2620, %vm2621
      %v2623 = vsel %vm2622, %v2615, %v2619
      %v2624 = vand.u32 2147483647, %v2431
      %vm2625 = vcmp.eq.f32.partialorder %v2624, 8.507059e+37
      %v2626 = vand.u32 %v2431, 2147483648
      %v2627 = vor.u32 1.1754944e-38, %v2626
      %v2628 = vsel %vm2625, %v2627, %v2623
      %v2629 = vmul.f32 1.0, %v2628
      %v2630 = vrcp.pop %v2432
      %v2631 = vmul.f32 %v2432, %v2630
      %v2632 = vsub.f32 1.0, %v2631
      %v2633 = vmul.f32 %v2630, %v2632
      %v2634 = vadd.f32 %v2630, %v2633
      %vm2635 = vweird.f32 %v2432
      %vm2636 = vweird.f32 %v2630
      %vm2637 = vmor %vm2635, %vm2636
      %v2638 = vsel %vm2637, %v2630, %v2634
      %v2639 = vand.u32 2147483647, %v2432
      %vm2640 = vcmp.eq.f32.partialorder %v2639, 8.507059e+37
      %v2641 = vand.u32 %v2432, 2147483648
      %v2642 = vor.u32 1.1754944e-38, %v2641
      %v2643 = vsel %vm2640, %v2642, %v2638
      %v2644 = vmul.f32 1.0, %v2643
      %v2645 = vrcp.pop %v2433
      %v2646 = vmul.f32 %v2433, %v2645
      %v2647 = vsub.f32 1.0, %v2646
      %v2648 = vmul.f32 %v2645, %v2647
      %v2649 = vadd.f32 %v2645, %v2648
      %vm2650 = vweird.f32 %v2433
      %vm2651 = vweird.f32 %v2645
      %vm2652 = vmor %vm2650, %vm2651
      %v2653 = vsel %vm2652, %v2645, %v2649
      %v2654 = vand.u32 2147483647, %v2433
      %vm2655 = vcmp.eq.f32.partialorder %v2654, 8.507059e+37
      %v2656 = vand.u32 %v2433, 2147483648
      %v2657 = vor.u32 1.1754944e-38, %v2656
      %v2658 = vsel %vm2655, %v2657, %v2653
      %v2659 = vmul.f32 1.0, %v2658
      %v2660 = vrcp.pop %v2434
      %v2661 = vmul.f32 %v2434, %v2660
      %v2662 = vsub.f32 1.0, %v2661
      %v2663 = vmul.f32 %v2660, %v2662
      %v2664 = vadd.f32 %v2660, %v2663
      %vm2665 = vweird.f32 %v2434
      %vm2666 = vweird.f32 %v2660
      %vm2667 = vmor %vm2665, %vm2666
      %v2668 = vsel %vm2667, %v2660, %v2664
      %v2669 = vand.u32 2147483647, %v2434
      %vm2670 = vcmp.eq.f32.partialorder %v2669, 8.507059e+37
      %v2671 = vand.u32 %v2434, 2147483648
      %v2672 = vor.u32 1.1754944e-38, %v2671
      %v2673 = vsel %vm2670, %v2672, %v2668
      %v2674 = vmul.f32 1.0, %v2673
      %v2675 = vtanh.pop %v2332
      %v2676 = vtanh.pop %v2334
      %v2677 = vtanh.pop %v2337
      %v2678 = vtanh.pop %v2339
      %v2679 = vtanh.pop %v2342
      %v2680 = vtanh.pop %v2344
      %v2681 = vtanh.pop %v2347
      %v2682 = vtanh.pop %v2349
      %v2683 = vtanh.pop %v2352
      %v2684 = vtanh.pop %v2354
      %v2685 = vtanh.pop %v2357
      %v2686 = vtanh.pop %v2359
      %v2687 = vtanh.pop %v2362
      %v2688 = vtanh.pop %v2364
      %v2689 = vtanh.pop %v2367
      %v2690 = vtanh.pop %v2369
      %v2691 = vld [vmem:[#allocation3] sm:$0xff]
      %v2692 = vld [vmem:[#allocation3 + $0x8] sm:$0xff]
      %v2693 = vld [vmem:[#allocation3 + $0x10] sm:$0xff]
      %v2694 = vld [vmem:[#allocation3 + $0x18] sm:$0xff]
      %v2695 = vld [vmem:[#allocation3 + $0x20] sm:$0xff]
      %v2696 = vld [vmem:[#allocation3 + $0x28] sm:$0xff]
      %v2697 = vld [vmem:[#allocation3 + $0x30] sm:$0xff]
      %v2698 = vld [vmem:[#allocation3 + $0x38] sm:$0xff]
      %v2699 = vld [vmem:[#allocation3 + $0x40] sm:$0xff]
      %v2700 = vld [vmem:[#allocation3 + $0x48] sm:$0xff]
      %v2701 = vld [vmem:[#allocation3 + $0x50] sm:$0xff]
      %v2702 = vld [vmem:[#allocation3 + $0x58] sm:$0xff]
      %v2703 = vld [vmem:[#allocation3 + $0x60] sm:$0xff]
      %v2704 = vld [vmem:[#allocation3 + $0x68] sm:$0xff]
      %v2705 = vld [vmem:[#allocation3 + $0x70] sm:$0xff]
      %v2706 = vld [vmem:[#allocation3 + $0x78] sm:$0xff]
      %2723 = vrot.lane.b32.xlu0 %v2691, 32
      %v2724 = vpop.permute.xlu0 %2723
      %2725 = vrot.lane.b32.xlu0 %v2692, 32
      %v2726 = vpop.permute.xlu0 %2725
      %2727 = vrot.lane.b32.xlu0 %v2693, 32
      %v2728 = vpop.permute.xlu0 %2727
      %2729 = vrot.lane.b32.xlu0 %v2694, 32
      %v2730 = vpop.permute.xlu0 %2729
      %2731 = vrot.lane.b32.xlu0 %v2695, 32
      %v2732 = vpop.permute.xlu0 %2731
      %2733 = vrot.lane.b32.xlu0 %v2696, 32
      %v2734 = vpop.permute.xlu0 %2733
      %2735 = vrot.lane.b32.xlu0 %v2697, 32
      %v2736 = vpop.permute.xlu0 %2735
      %2737 = vrot.lane.b32.xlu0 %v2698, 32
      %v2738 = vpop.permute.xlu0 %2737
      %2739 = vrot.lane.b32.xlu0 %v2699, 32
      %v2740 = vpop.permute.xlu0 %2739
      %2741 = vrot.lane.b32.xlu0 %v2700, 32
      %v2742 = vpop.permute.xlu0 %2741
      %2743 = vrot.lane.b32.xlu0 %v2701, 32
      %v2744 = vpop.permute.xlu0 %2743
      %2745 = vrot.lane.b32.xlu0 %v2702, 32
      %v2746 = vpop.permute.xlu0 %2745
      %2747 = vrot.lane.b32.xlu0 %v2703, 32
      %v2748 = vpop.permute.xlu0 %2747
      %2749 = vrot.lane.b32.xlu0 %v2704, 32
      %v2750 = vpop.permute.xlu0 %2749
      %2751 = vrot.lane.b32.xlu0 %v2705, 32
      %v2752 = vpop.permute.xlu0 %2751
      %2753 = vrot.lane.b32.xlu0 %v2706, 32
      %v2754 = vpop.permute.xlu0 %2753
      %v2771 = vmul.f32 %v2449, %v2724
      %v2772 = vmul.f32 %v2464, %v2726
      %v2773 = vmul.f32 %v2479, %v2728
      %v2774 = vmul.f32 %v2494, %v2730
      %v2775 = vmul.f32 %v2509, %v2732
      %v2776 = vmul.f32 %v2524, %v2734
      %v2777 = vmul.f32 %v2539, %v2736
      %v2778 = vmul.f32 %v2554, %v2738
      %v2779 = vmul.f32 %v2569, %v2740
      %v2780 = vmul.f32 %v2584, %v2742
      %v2781 = vmul.f32 %v2599, %v2744
      %v2782 = vmul.f32 %v2614, %v2746
      %v2783 = vmul.f32 %v2629, %v2748
      %v2784 = vmul.f32 %v2644, %v2750
      %v2785 = vmul.f32 %v2659, %v2752
      %v2786 = vmul.f32 %v2674, %v2754
      %2803 = vrot.lane.b32.xlu0 %v2675, 32
      %v2804 = vpop.permute.xlu0 %2803
      %2805 = vrot.lane.b32.xlu0 %v2676, 32
      %v2806 = vpop.permute.xlu0 %2805
      %2807 = vrot.lane.b32.xlu0 %v2677, 32
      %v2808 = vpop.permute.xlu0 %2807
      %2809 = vrot.lane.b32.xlu0 %v2678, 32
      %v2810 = vpop.permute.xlu0 %2809
      %2811 = vrot.lane.b32.xlu0 %v2679, 32
      %v2812 = vpop.permute.xlu0 %2811
      %2813 = vrot.lane.b32.xlu0 %v2680, 32
      %v2814 = vpop.permute.xlu0 %2813
      %2815 = vrot.lane.b32.xlu0 %v2681, 32
      %v2816 = vpop.permute.xlu0 %2815
      %2817 = vrot.lane.b32.xlu0 %v2682, 32
      %v2818 = vpop.permute.xlu0 %2817
      %2819 = vrot.lane.b32.xlu0 %v2683, 32
      %v2820 = vpop.permute.xlu0 %2819
      %2821 = vrot.lane.b32.xlu0 %v2684, 32
      %v2822 = vpop.permute.xlu0 %2821
      %2823 = vrot.lane.b32.xlu0 %v2685, 32
      %v2824 = vpop.permute.xlu0 %2823
      %2825 = vrot.lane.b32.xlu0 %v2686, 32
      %v2826 = vpop.permute.xlu0 %2825
      %2827 = vrot.lane.b32.xlu0 %v2687, 32
      %v2828 = vpop.permute.xlu0 %2827
      %2829 = vrot.lane.b32.xlu0 %v2688, 32
      %v2830 = vpop.permute.xlu0 %2829
      %2831 = vrot.lane.b32.xlu0 %v2689, 32
      %v2832 = vpop.permute.xlu0 %2831
      %2833 = vrot.lane.b32.xlu0 %v2690, 32
      %v2834 = vpop.permute.xlu0 %2833
      %v2851 = vmul.f32 %v2449, %v2804
      %v2852 = vmul.f32 %v2464, %v2806
      %v2853 = vmul.f32 %v2479, %v2808
      %v2854 = vmul.f32 %v2494, %v2810
      %v2855 = vmul.f32 %v2509, %v2812
      %v2856 = vmul.f32 %v2524, %v2814
      %v2857 = vmul.f32 %v2539, %v2816
      %v2858 = vmul.f32 %v2554, %v2818
      %v2859 = vmul.f32 %v2569, %v2820
      %v2860 = vmul.f32 %v2584, %v2822
      %v2861 = vmul.f32 %v2599, %v2824
      %v2862 = vmul.f32 %v2614, %v2826
      %v2863 = vmul.f32 %v2629, %v2828
      %v2864 = vmul.f32 %v2644, %v2830
      %v2865 = vmul.f32 %v2659, %v2832
      %v2866 = vmul.f32 %v2674, %v2834
      %2883 = vrot.lane.b32.xlu0 %v2851, 32
      %v2884 = vpop.permute.xlu0 %2883
      %2885 = vrot.lane.b32.xlu0 %v2852, 32
      %v2886 = vpop.permute.xlu0 %2885
      %2887 = vrot.lane.b32.xlu0 %v2853, 32
      %v2888 = vpop.permute.xlu0 %2887
      %2889 = vrot.lane.b32.xlu0 %v2854, 32
      %v2890 = vpop.permute.xlu0 %2889
      %2891 = vrot.lane.b32.xlu0 %v2855, 32
      %v2892 = vpop.permute.xlu0 %2891
      %2893 = vrot.lane.b32.xlu0 %v2856, 32
      %v2894 = vpop.permute.xlu0 %2893
      %2895 = vrot.lane.b32.xlu0 %v2857, 32
      %v2896 = vpop.permute.xlu0 %2895
      %2897 = vrot.lane.b32.xlu0 %v2858, 32
      %v2898 = vpop.permute.xlu0 %2897
      %2899 = vrot.lane.b32.xlu0 %v2859, 32
      %v2900 = vpop.permute.xlu0 %2899
      %2901 = vrot.lane.b32.xlu0 %v2860, 32
      %v2902 = vpop.permute.xlu0 %2901
      %2903 = vrot.lane.b32.xlu0 %v2861, 32
      %v2904 = vpop.permute.xlu0 %2903
      %2905 = vrot.lane.b32.xlu0 %v2862, 32
      %v2906 = vpop.permute.xlu0 %2905
      %2907 = vrot.lane.b32.xlu0 %v2863, 32
      %v2908 = vpop.permute.xlu0 %2907
      %2909 = vrot.lane.b32.xlu0 %v2864, 32
      %v2910 = vpop.permute.xlu0 %2909
      %2911 = vrot.lane.b32.xlu0 %v2865, 32
      %v2912 = vpop.permute.xlu0 %2911
      %2913 = vrot.lane.b32.xlu0 %v2866, 32
      %v2914 = vpop.permute.xlu0 %2913
      %v2931 = vadd.f32 %v2771, %v2884
      %v2932 = vadd.f32 %v2772, %v2886
      %v2933 = vadd.f32 %v2773, %v2888
      %v2934 = vadd.f32 %v2774, %v2890
      %v2935 = vadd.f32 %v2775, %v2892
      %v2936 = vadd.f32 %v2776, %v2894
      %v2937 = vadd.f32 %v2777, %v2896
      %v2938 = vadd.f32 %v2778, %v2898
      %v2939 = vadd.f32 %v2779, %v2900
      %v2940 = vadd.f32 %v2780, %v2902
      %v2941 = vadd.f32 %v2781, %v2904
      %v2942 = vadd.f32 %v2782, %v2906
      %v2943 = vadd.f32 %v2783, %v2908
      %v2944 = vadd.f32 %v2784, %v2910
      %v2945 = vadd.f32 %v2785, %v2912
      %v2946 = vadd.f32 %v2786, %v2914
      %v2947 = vtanh.pop %v2931
      %v2948 = vtanh.pop %v2932
      %v2949 = vtanh.pop %v2933
      %v2950 = vtanh.pop %v2934
      %v2951 = vtanh.pop %v2935
      %v2952 = vtanh.pop %v2936
      %v2953 = vtanh.pop %v2937
      %v2954 = vtanh.pop %v2938
      %v2955 = vtanh.pop %v2939
      %v2956 = vtanh.pop %v2940
      %v2957 = vtanh.pop %v2941
      %v2958 = vtanh.pop %v2942
      %v2959 = vtanh.pop %v2943
      %v2960 = vtanh.pop %v2944
      %v2961 = vtanh.pop %v2945
      %v2962 = vtanh.pop %v2946
      %2979 = vrot.lane.b32.xlu0 %v2947, 32
      %v2980 = vpop.permute.xlu0 %2979
      %2981 = vrot.lane.b32.xlu0 %v2948, 32
      %v2982 = vpop.permute.xlu0 %2981
      %2983 = vrot.lane.b32.xlu0 %v2949, 32
      %v2984 = vpop.permute.xlu0 %2983
      %2985 = vrot.lane.b32.xlu0 %v2950, 32
      %v2986 = vpop.permute.xlu0 %2985
      %2987 = vrot.lane.b32.xlu0 %v2951, 32
      %v2988 = vpop.permute.xlu0 %2987
      %2989 = vrot.lane.b32.xlu0 %v2952, 32
      %v2990 = vpop.permute.xlu0 %2989
      %2991 = vrot.lane.b32.xlu0 %v2953, 32
      %v2992 = vpop.permute.xlu0 %2991
      %2993 = vrot.lane.b32.xlu0 %v2954, 32
      %v2994 = vpop.permute.xlu0 %2993
      %2995 = vrot.lane.b32.xlu0 %v2955, 32
      %v2996 = vpop.permute.xlu0 %2995
      %2997 = vrot.lane.b32.xlu0 %v2956, 32
      %v2998 = vpop.permute.xlu0 %2997
      %2999 = vrot.lane.b32.xlu0 %v2957, 32
      %v3000 = vpop.permute.xlu0 %2999
      %3001 = vrot.lane.b32.xlu0 %v2958, 32
      %v3002 = vpop.permute.xlu0 %3001
      %3003 = vrot.lane.b32.xlu0 %v2959, 32
      %v3004 = vpop.permute.xlu0 %3003
      %3005 = vrot.lane.b32.xlu0 %v2960, 32
      %v3006 = vpop.permute.xlu0 %3005
      %3007 = vrot.lane.b32.xlu0 %v2961, 32
      %v3008 = vpop.permute.xlu0 %3007
      %3009 = vrot.lane.b32.xlu0 %v2962, 32
      %v3010 = vpop.permute.xlu0 %3009
      %v3027 = vmul.f32 %v2449, %v2980
      %v3028 = vmul.f32 %v2464, %v2982
      %v3029 = vmul.f32 %v2479, %v2984
      %v3030 = vmul.f32 %v2494, %v2986
      %v3031 = vmul.f32 %v2509, %v2988
      %v3032 = vmul.f32 %v2524, %v2990
      %v3033 = vmul.f32 %v2539, %v2992
      %v3034 = vmul.f32 %v2554, %v2994
      %v3035 = vmul.f32 %v2569, %v2996
      %v3036 = vmul.f32 %v2584, %v2998
      %v3037 = vmul.f32 %v2599, %v3000
      %v3038 = vmul.f32 %v2614, %v3002
      %v3039 = vmul.f32 %v2629, %v3004
      %v3040 = vmul.f32 %v2644, %v3006
      %v3041 = vmul.f32 %v2659, %v3008
      %v3042 = vmul.f32 %v2674, %v3010
      %3059 = vrot.lane.b32.xlu0 %v2931, 96
      %v3060 = vpop.permute.xlu0 %3059
      %3061 = vrot.lane.b32.xlu0 %v2932, 96
      %v3062 = vpop.permute.xlu0 %3061
      %3063 = vrot.lane.b32.xlu0 %v2933, 96
      %v3064 = vpop.permute.xlu0 %3063
      %3065 = vrot.lane.b32.xlu0 %v2934, 96
      %v3066 = vpop.permute.xlu0 %3065
      %3067 = vrot.lane.b32.xlu0 %v2935, 96
      %v3068 = vpop.permute.xlu0 %3067
      %3069 = vrot.lane.b32.xlu0 %v2936, 96
      %v3070 = vpop.permute.xlu0 %3069
      %3071 = vrot.lane.b32.xlu0 %v2937, 96
      %v3072 = vpop.permute.xlu0 %3071
      %3073 = vrot.lane.b32.xlu0 %v2938, 96
      %v3074 = vpop.permute.xlu0 %3073
      %3075 = vrot.lane.b32.xlu0 %v2939, 96
      %v3076 = vpop.permute.xlu0 %3075
      %3077 = vrot.lane.b32.xlu0 %v2940, 96
      %v3078 = vpop.permute.xlu0 %3077
      %3079 = vrot.lane.b32.xlu0 %v2941, 96
      %v3080 = vpop.permute.xlu0 %3079
      %3081 = vrot.lane.b32.xlu0 %v2942, 96
      %v3082 = vpop.permute.xlu0 %3081
      %3083 = vrot.lane.b32.xlu0 %v2943, 96
      %v3084 = vpop.permute.xlu0 %3083
      %3085 = vrot.lane.b32.xlu0 %v2944, 96
      %v3086 = vpop.permute.xlu0 %3085
      %3087 = vrot.lane.b32.xlu0 %v2945, 96
      %v3088 = vpop.permute.xlu0 %3087
      %3089 = vrot.lane.b32.xlu0 %v2946, 96
      %v3090 = vpop.permute.xlu0 %3089
      %vm3107 = vcmask 261120
      %3108 = vst.msk [vmem:[#allocation3] sm:$0xff] %vm3107, %v3060
      %3109 = vst.msk [vmem:[#allocation3 + $0x8] sm:$0xff] %vm3107, %v3062
      %3110 = vst.msk [vmem:[#allocation3 + $0x10] sm:$0xff] %vm3107, %v3064
      %3111 = vst.msk [vmem:[#allocation3 + $0x18] sm:$0xff] %vm3107, %v3066
      %3112 = vst.msk [vmem:[#allocation3 + $0x20] sm:$0xff] %vm3107, %v3068
      %3113 = vst.msk [vmem:[#allocation3 + $0x28] sm:$0xff] %vm3107, %v3070
      %3114 = vst.msk [vmem:[#allocation3 + $0x30] sm:$0xff] %vm3107, %v3072
      %3115 = vst.msk [vmem:[#allocation3 + $0x38] sm:$0xff] %vm3107, %v3074
      %3116 = vst.msk [vmem:[#allocation3 + $0x40] sm:$0xff] %vm3107, %v3076
      %3117 = vst.msk [vmem:[#allocation3 + $0x48] sm:$0xff] %vm3107, %v3078
      %3118 = vst.msk [vmem:[#allocation3 + $0x50] sm:$0xff] %vm3107, %v3080
      %3119 = vst.msk [vmem:[#allocation3 + $0x58] sm:$0xff] %vm3107, %v3082
      %3120 = vst.msk [vmem:[#allocation3 + $0x60] sm:$0xff] %vm3107, %v3084
      %3121 = vst.msk [vmem:[#allocation3 + $0x68] sm:$0xff] %vm3107, %v3086
      %3122 = vst.msk [vmem:[#allocation3 + $0x70] sm:$0xff] %vm3107, %v3088
      %3123 = vst.msk [vmem:[#allocation3 + $0x78] sm:$0xff] %vm3107, %v3090
      %3140 = vrot.lane.b32.xlu0 %v3027, 64
      %v3141 = vpop.permute.xlu0 %3140
      %3142 = vrot.lane.b32.xlu0 %v3028, 64
      %v3143 = vpop.permute.xlu0 %3142
      %3144 = vrot.lane.b32.xlu0 %v3029, 64
      %v3145 = vpop.permute.xlu0 %3144
      %3146 = vrot.lane.b32.xlu0 %v3030, 64
      %v3147 = vpop.permute.xlu0 %3146
      %3148 = vrot.lane.b32.xlu0 %v3031, 64
      %v3149 = vpop.permute.xlu0 %3148
      %3150 = vrot.lane.b32.xlu0 %v3032, 64
      %v3151 = vpop.permute.xlu0 %3150
      %3152 = vrot.lane.b32.xlu0 %v3033, 64
      %v3153 = vpop.permute.xlu0 %3152
      %3154 = vrot.lane.b32.xlu0 %v3034, 64
      %v3155 = vpop.permute.xlu0 %3154
      %3156 = vrot.lane.b32.xlu0 %v3035, 64
      %v3157 = vpop.permute.xlu0 %3156
      %3158 = vrot.lane.b32.xlu0 %v3036, 64
      %v3159 = vpop.permute.xlu0 %3158
      %3160 = vrot.lane.b32.xlu0 %v3037, 64
      %v3161 = vpop.permute.xlu0 %3160
      %3162 = vrot.lane.b32.xlu0 %v3038, 64
      %v3163 = vpop.permute.xlu0 %3162
      %3164 = vrot.lane.b32.xlu0 %v3039, 64
      %v3165 = vpop.permute.xlu0 %3164
      %3166 = vrot.lane.b32.xlu0 %v3040, 64
      %v3167 = vpop.permute.xlu0 %3166
      %3168 = vrot.lane.b32.xlu0 %v3041, 64
      %v3169 = vpop.permute.xlu0 %3168
      %3170 = vrot.lane.b32.xlu0 %v3042, 64
      %v3171 = vpop.permute.xlu0 %3170
      %3188 = vst.msk [vmem:[#allocation2] sm:$0xff] %vm3107, %v3141
      %3189 = vst.msk [vmem:[#allocation2 + $0x8] sm:$0xff] %vm3107, %v3143
      %3190 = vst.msk [vmem:[#allocation2 + $0x10] sm:$0xff] %vm3107, %v3145
      %3191 = vst.msk [vmem:[#allocation2 + $0x18] sm:$0xff] %vm3107, %v3147
      %3192 = vst.msk [vmem:[#allocation2 + $0x20] sm:$0xff] %vm3107, %v3149
      %3193 = vst.msk [vmem:[#allocation2 + $0x28] sm:$0xff] %vm3107, %v3151
      %3194 = vst.msk [vmem:[#allocation2 + $0x30] sm:$0xff] %vm3107, %v3153
      %3195 = vst.msk [vmem:[#allocation2 + $0x38] sm:$0xff] %vm3107, %v3155
      %3196 = vst.msk [vmem:[#allocation2 + $0x40] sm:$0xff] %vm3107, %v3157
      %3197 = vst.msk [vmem:[#allocation2 + $0x48] sm:$0xff] %vm3107, %v3159
      %3198 = vst.msk [vmem:[#allocation2 + $0x50] sm:$0xff] %vm3107, %v3161
      %3199 = vst.msk [vmem:[#allocation2 + $0x58] sm:$0xff] %vm3107, %v3163
      %3200 = vst.msk [vmem:[#allocation2 + $0x60] sm:$0xff] %vm3107, %v3165
      %3201 = vst.msk [vmem:[#allocation2 + $0x68] sm:$0xff] %vm3107, %v3167
      %3202 = vst.msk [vmem:[#allocation2 + $0x70] sm:$0xff] %vm3107, %v3169
      %3203 = vst.msk [vmem:[#allocation2 + $0x78] sm:$0xff] %vm3107, %v3171
      %p3204 = scmp.ge.s32.totalorder %s19, 3
      // Predicated region
      $region45: #{convlstm_forward.1} parent=31 // pred_check
        %p3205 = pneg %p3204
      $region46: #{convlstm_forward.1} parent=31 // pred_check_branch
        %3207 = sbr.rel (%p3205) target = $region48
      $region47: #{convlstm_forward.1} parent=31 // pred_region
        %3208 = vst.msk [vmem:[%s239] sm:$0xff] %vm3107, %v3141
        %3209 = vst.msk [vmem:[%s239 + $0x8] sm:$0xff] %vm3107, %v3143
        %3210 = vst.msk [vmem:[%s239 + $0x10] sm:$0xff] %vm3107, %v3145
        %3211 = vst.msk [vmem:[%s239 + $0x18] sm:$0xff] %vm3107, %v3147
        %3212 = vst.msk [vmem:[%s239 + $0x20] sm:$0xff] %vm3107, %v3149
        %3213 = vst.msk [vmem:[%s239 + $0x28] sm:$0xff] %vm3107, %v3151
        %3214 = vst.msk [vmem:[%s239 + $0x30] sm:$0xff] %vm3107, %v3153
        %3215 = vst.msk [vmem:[%s239 + $0x38] sm:$0xff] %vm3107, %v3155
        %3216 = vst.msk [vmem:[%s239 + $0x40] sm:$0xff] %vm3107, %v3157
        %3217 = vst.msk [vmem:[%s239 + $0x48] sm:$0xff] %vm3107, %v3159
        %3218 = vst.msk [vmem:[%s239 + $0x50] sm:$0xff] %vm3107, %v3161
        %3219 = vst.msk [vmem:[%s239 + $0x58] sm:$0xff] %vm3107, %v3163
        %3220 = vst.msk [vmem:[%s239 + $0x60] sm:$0xff] %vm3107, %v3165
        %3221 = vst.msk [vmem:[%s239 + $0x68] sm:$0xff] %vm3107, %v3167
        %3222 = vst.msk [vmem:[%s239 + $0x70] sm:$0xff] %vm3107, %v3169
        %3223 = vst.msk [vmem:[%s239 + $0x78] sm:$0xff] %vm3107, %v3171
      $region48: #{convlstm_forward.1} parent=31 // pred_fallthru
        _
      %s3224 = ssub.s32 %s19, 3
      %p3225 = scmp.gt.s32.totalorder %s3224, 0
      %s3226 = scalar_select %p3225, %s3224, 0
      %s3227 = smul.u32 2, %s18
      %p3228 = scmp.lt.s32.totalorder %s3226, 2
      %s3229 = scalar_select %p3228, %s3226, 2
      %p3230 = scmp.lt.s32.totalorder %s3227, 1
      %s3231 = scalar_select %p3230, %s3227, 1
      %s3232 = smul.addr %s3231, 8
      %s3233 = smul.addr %s3229, 16
      %s3234 = sadd.s32 %s3232, %s3233
      %s3235 = smul.addr %s3234, 8
      %s3236 = scalar_lea.vmem %s3, %s3235
      // Predicated region
      $region49: #{convlstm_forward.1} parent=31 // pred_check
        %p3237 = pneg %p126
      $region50: #{convlstm_forward.1} parent=31 // pred_check_branch
        %3239 = sbr.rel (%p3237) target = $region52
      $region51: #{convlstm_forward.1} parent=31 // pred_region
        %s3240 = ssub.s32 %s19, 3
        %p3241 = scmp.gt.s32.totalorder %s3240, 0
        %s3242 = scalar_select %p3241, %s3240, 0
        %s3243 = smul.u32 2, %s18
      $region52: #{convlstm_forward.1} parent=31 // pred_fallthru
        _
    $region32: #{convlstm_forward.1} parent=5 // pred_fallthru
      _
    %p3244 = scmp.le.s32.totalorder 2, %s9
    // Predicated region
    $region53: #{convlstm_forward.1} parent=5 // pred_check
      %p3245 = pneg %p3244
    $region54: #{convlstm_forward.1} parent=5 // pred_check_branch
      %3247 = sbr.rel (%p3245) target = $region56
    $region55: #{convlstm_forward.1} parent=5 // pred_region
      %s3248 = ssub.s32 %s9, 2
      // Predicated region
      $region57: #{convlstm_forward.1} parent=55 // pred_check
        %p3249 = pneg %p132
      $region58: #{convlstm_forward.1} parent=55 // pred_check_branch
        %3251 = sbr.rel (%p3249) target = $region60
      $region59: #{convlstm_forward.1} parent=55 // pred_region
        %s3252 = ssub.s32 %s21, 3
        %p3253 = scmp.gt.s32.totalorder %s3252, 0
        %s3254 = scalar_select %p3253, %s3252, 0
        %s3255 = smul.u32 2, %s20
        %p3256 = scmp.lt.s32.totalorder %s3254, 2
        %s3257 = scalar_select %p3256, %s3254, 2
        %p3258 = scmp.lt.s32.totalorder %s3255, 1
        %s3259 = scalar_select %p3258, %s3255, 1
        %s3260 = smul.addr %s3259, 8
        %s3261 = smul.addr %s3257, 16
        %s3262 = sadd.s32 %s3260, %s3261
        %s3263 = smul.addr %s3262, 8
        %s3264 = scalar_lea.vmem %s3, %s3263
      $region60: #{convlstm_forward.1} parent=55 // pred_fallthru
        _
    $region56: #{convlstm_forward.1} parent=5 // pred_fallthru
      _
  $region6: #{convlstm_forward.1} parent=0 // loop_footer
    %s13 = sadd.s32 1, %s9
  $region7: #{convlstm_forward.1} parent=0 // loop_footer_branch
    %8 = sbr.rel target = $region3
  $region8: #{convlstm_forward.1} parent=0 // loop_exit
    _

</llo_original>
